<compile_context>
chip_gen: v7x
topology: tpu7x:2x2x1
jax: 0.10.0
libtpu: 0.0.40
codegen_flags: <defaults>
</compile_context>

<pallas_src>
import functools

import jax
import jax.numpy as jnp
from jax import lax
from jax.experimental import pallas as pl
from jax.experimental.pallas import tpu as pltpu

# ----- synthetic tiny causal-LM hyperparameters -----
VOCAB = 128
HIDDEN = 64
NUM_HEADS = 2
HEAD_DIM = HIDDEN // NUM_HEADS
FFN = 128
MAX_POS = 64

NEG_INF = -1e9


# ---------------------------------------------------------------------------
# Fused Pallas kernel: whole per-token pipeline + DecoderModel scoring
# ---------------------------------------------------------------------------
def _fused_decoder_kernel(h_ref, kmask_ref, lab_ref, lmask_ref,
                          wq_ref, wk_ref, wv_ref, wo_ref,
                          w1_ref, w2_ref, lm_ref, ln_ref,
                          out_ref, *, num_heads, head_dim, scale):
    bb, L, D = h_ref.shape
    M = bb * L
    V = lm_ref.shape[1]

    ln = ln_ref[...]            # (6, D) f32: ln1_g, ln1_b, ln2_g, ln2_b, lnf_g, lnf_b

    def layer_norm(x, g, b):
        mu = jnp.mean(x, axis=-1, keepdims=True)
        xc = x - mu
        var = jnp.mean(xc * xc, axis=-1, keepdims=True)
        return xc * lax.rsqrt(var + 1e-5) * g + b

    # Residual stream flattened to (bb*L, D): every token-wise matmul below
    # runs ONCE per grid step with a large MXU M dimension.
    h = h_ref[...].reshape(M, D)                                     # f32

    # Causal + key-mask additive bias rebuilt on the VPU (never touches HBM).
    row_iota = lax.broadcasted_iota(jnp.int32, (L, L), 0)
    col_iota = lax.broadcasted_iota(jnp.int32, (L, L), 1)
    causal = (col_iota <= row_iota).astype(jnp.float32)              # (L, L)
    visible = causal[None, :, :] * kmask_ref[...]                    # (bb, L, L)
    bias = (1.0 - visible) * NEG_INF

    # ---- attention block ----
    x = layer_norm(h, ln[0:1, :], ln[1:2, :]).astype(jnp.bfloat16)   # (M, D)
    attn_out = jnp.zeros((M, D), jnp.float32)
    for hh in range(num_heads):          # tiny static loop; weights pre-split per head
        q = jnp.dot(x, wq_ref[hh], preferred_element_type=jnp.float32)   # (M, Dh)
        k = jnp.dot(x, wk_ref[hh], preferred_element_type=jnp.float32)   # (M, Dh)
        v = jnp.dot(x, wv_ref[hh], preferred_element_type=jnp.float32)   # (M, Dh)
        q3 = q.reshape(bb, L, head_dim).astype(jnp.bfloat16)
        k3 = k.reshape(bb, L, head_dim).astype(jnp.bfloat16)
        v3 = v.reshape(bb, L, head_dim).astype(jnp.bfloat16)
        # MXU consumes K transposed directly (no explicit .T / XLU transpose).
        s = jnp.einsum('bqd,bkd->bqk', q3, k3,
                       preferred_element_type=jnp.float32) * scale + bias   # (bb, L, L)
        m = jnp.max(s, axis=-1, keepdims=True)
        p = jnp.exp(s - m)
        denom = jnp.maximum(jnp.sum(p, axis=-1, keepdims=True), 1e-20)   # safe floor
        p = p * pl.reciprocal(denom, approx=True)                        # EUP, not VALU div
        ctx = jnp.einsum('bqk,bkd->bqd', p.astype(jnp.bfloat16), v3,
                         preferred_element_type=jnp.float32)             # (bb, L, Dh)
        attn_out = attn_out + jnp.dot(
            ctx.reshape(M, head_dim).astype(jnp.bfloat16), wo_ref[hh],
            preferred_element_type=jnp.float32)                          # (M, D)
    h = h + attn_out

    # ---- MLP block ----
    x = layer_norm(h, ln[2:3, :], ln[3:4, :]).astype(jnp.bfloat16)
    ff = jax.nn.gelu(jnp.dot(x, w1_ref[...], preferred_element_type=jnp.float32),
                     approximate=True)                                   # (M, FFN)
    h = h + jnp.dot(ff.astype(jnp.bfloat16), w2_ref[...],
                    preferred_element_type=jnp.float32)                  # (M, D)

    # ---- tied LM head + DecoderModel scoring ----
    x = layer_norm(h, ln[4:5, :], ln[5:6, :]).astype(jnp.bfloat16)
    logits = jnp.dot(x, lm_ref[...], preferred_element_type=jnp.float32)  # (M, V)
    mx = jnp.max(logits, axis=-1, keepdims=True)
    shifted = logits - mx
    lse = jnp.log(jnp.sum(jnp.exp(shifted), axis=-1, keepdims=True))      # (M, 1)

    # Label gather via iota comparison (no dense (L, V) logp / one-hot tensor).
    lab = lab_ref[...].reshape(M, 1)                                      # int32
    lmask = lmask_ref[...].reshape(M, 1)                                  # f32
    onehot = (lax.broadcasted_iota(jnp.int32, (M, V), 1) == lab).astype(jnp.float32)
    label_logit = jnp.sum(shifted * onehot, axis=-1, keepdims=True)       # (M, 1)
    row_score = (label_logit - lse) * lmask                               # (M, 1)
    out_ref[...] = jnp.sum(row_score.reshape(bb, L, 1), axis=1, keepdims=True)  # (bb,1,1)


# ---------------------------------------------------------------------------
# Parameters
# ---------------------------------------------------------------------------
def init_params(key):
    ks = jax.random.split(key, 8)
    std = 0.02

    def n(k, shape):
        return (std * jax.random.normal(k, shape)).astype(jnp.float32)

    ones = lambda: jnp.ones((HIDDEN,), jnp.float32)
    zeros = lambda: jnp.zeros((HIDDEN,), jnp.float32)
    return {
        "tok_emb": n(ks[0], (VOCAB, HIDDEN)),
        "pos_emb": n(ks[1], (MAX_POS, HIDDEN)),
        "ln1_g": ones(), "ln1_b": zeros(),
        "wq": n(ks[2], (HIDDEN, HIDDEN)),
        "wk": n(ks[3], (HIDDEN, HIDDEN)),
        "wv": n(ks[4], (HIDDEN, HIDDEN)),
        "wo": n(ks[5], (HIDDEN, HIDDEN)),
        "ln2_g": ones(), "ln2_b": zeros(),
        "w1": n(ks[6], (HIDDEN, FFN)),
        "w2": n(ks[7], (FFN, HIDDEN)),
        "lnf_g": ones(), "lnf_b": zeros(),
    }


def _pack_weights(params):
    """bf16 MXU operands; per-head Q/K/V/Wo splits done here (free in XLA) so
    the kernel never slices an activation at a non-128-aligned lane offset."""
    def split_heads_cols(w):    # (D, D) -> (H, D, Dh); head h gets cols h*Dh:(h+1)*Dh
        return jnp.transpose(w.reshape(HIDDEN, NUM_HEADS, HEAD_DIM), (1, 0, 2))

    ln = jnp.stack([params["ln1_g"], params["ln1_b"],
                    params["ln2_g"], params["ln2_b"],
                    params["lnf_g"], params["lnf_b"]], axis=0)
    return {
        "wq_h": split_heads_cols(params["wq"]).astype(jnp.bfloat16),      # (H, D, Dh)
        "wk_h": split_heads_cols(params["wk"]).astype(jnp.bfloat16),      # (H, D, Dh)
        "wv_h": split_heads_cols(params["wv"]).astype(jnp.bfloat16),      # (H, D, Dh)
        "wo_h": params["wo"].reshape(NUM_HEADS, HEAD_DIM, HIDDEN).astype(jnp.bfloat16),
        "w1": params["w1"].astype(jnp.bfloat16),
        "w2": params["w2"].astype(jnp.bfloat16),
        "lm": params["tok_emb"].T.astype(jnp.bfloat16),                   # tied LM head
        "ln": ln.astype(jnp.float32),
    }


def _pick_block_batch(B, L, requested=None):
    """Choose bb so bb*L feeds the MXU (>=128 rows) while keeping >=2 grid
    steps when possible (v7x megacore); fall back gracefully at tiny B."""
    if requested is not None:
        assert B % requested == 0, "block_batch must divide batch size"
        return requested
    divisors = [d for d in range(1, B + 1) if B % d == 0]
    for d in divisors:                       # smallest bb that fills the MXU rows
        if d * L >= 128 and B // d >= 2:
            return d
    for d in reversed(divisors):             # largest bb that still leaves >=2 steps
        if B // d >= 2:
            return d
    return B


# ---------------------------------------------------------------------------
# Forward passes
# ---------------------------------------------------------------------------
def decoder_model_forward_pallas(params, batch, *, block_batch=None,
                                 check_inputs=False):
    input_ids = batch["input_ids"]
    labels = batch["labels"]
    _, prefix_length = input_ids.shape

    # model_inputs: concat prefix + labels (ids and attention mask)
    ids = jnp.concatenate([input_ids, labels], axis=-1)                        # (B, L)
    mask = jnp.concatenate(
        [batch["attention_mask"], batch["labels_attention_mask"]], axis=-1)    # (B, L)
    if check_inputs:
        # Host-sync readback; kept off the hot dispatch path by default.
        assert bool(jnp.all(mask[:, 0] == 1)), \
            "First element in the attention mask should be 1."
    position_ids = jnp.cumsum(mask.astype(jnp.int32), axis=-1) - 1
    B, L = ids.shape

    # glue: embedding gather + positional embedding stay in XLA
    h = (params["tok_emb"][ids]
         + params["pos_emb"][jnp.clip(position_ids, 0, MAX_POS - 1)]
         ).astype(jnp.float32)                                                 # (B, L, D)

    kmask = mask.astype(jnp.float32).reshape(B, 1, L)                          # key mask

    # Per-position label id / label mask aligned to the scored logit positions
    # logits[:, prefix-1:-1] -- tiny O(B*L) arrays, no dense one-hot in HBM.
    lab_full = jnp.zeros((B, L), jnp.int32)
    lab_full = lax.dynamic_update_slice(
        lab_full, labels.astype(jnp.int32), (0, prefix_length - 1))
    lmask_full = jnp.zeros((B, L), jnp.float32)
    lmask_full = lax.dynamic_update_slice(
        lmask_full, batch["labels_attention_mask"].astype(jnp.float32),
        (0, prefix_length - 1))
    lab_full = lab_full[..., None]                                             # (B, L, 1)
    lmask_full = lmask_full[..., None]                                         # (B, L, 1)

    w = _pack_weights(params)

    bb = _pick_block_batch(B, L, block_batch)
    grid = (B // bb,)

    # Advisory cost estimate for XLA scheduling around the fused custom call.
    flops = int(2 * B * L * (4 * HIDDEN * HIDDEN + 2 * HIDDEN * FFN + HIDDEN * VOCAB)
                + 4 * B * L * L * HIDDEN)
    transcendentals = int(B * NUM_HEADS * L * L + B * L * (VOCAB + FFN))
    operands = [h, kmask, lab_full, lmask_full] + list(w.values())
    bytes_accessed = int(sum(int(a.size) * a.dtype.itemsize for a in operands) + B * 4)

    kern = functools.partial(_fused_decoder_kernel, num_heads=NUM_HEADS,
                             head_dim=HEAD_DIM, scale=1.0 / (HEAD_DIM ** 0.5))

    out = pl.pallas_call(
        kern,
        out_shape=jax.ShapeDtypeStruct((B, 1, 1), jnp.float32),
        grid=grid,
        in_specs=[
            pl.BlockSpec((bb, L, HIDDEN), lambda i: (i, 0, 0)),                # h
            pl.BlockSpec((bb, 1, L), lambda i: (i, 0, 0)),                     # key mask
            pl.BlockSpec((bb, L, 1), lambda i: (i, 0, 0)),                     # labels
            pl.BlockSpec((bb, L, 1), lambda i: (i, 0, 0)),                     # label mask
            pl.BlockSpec((NUM_HEADS, HIDDEN, HEAD_DIM), lambda i: (0, 0, 0)),  # wq (per head)
            pl.BlockSpec((NUM_HEADS, HIDDEN, HEAD_DIM), lambda i: (0, 0, 0)),  # wk (per head)
            pl.BlockSpec((NUM_HEADS, HIDDEN, HEAD_DIM), lambda i: (0, 0, 0)),  # wv (per head)
            pl.BlockSpec((NUM_HEADS, HEAD_DIM, HIDDEN), lambda i: (0, 0, 0)),  # wo (per head)
            pl.BlockSpec((HIDDEN, FFN), lambda i: (0, 0)),                     # w1
            pl.BlockSpec((FFN, HIDDEN), lambda i: (0, 0)),                     # w2
            pl.BlockSpec((HIDDEN, VOCAB), lambda i: (0, 0)),                   # lm head
            pl.BlockSpec((6, HIDDEN), lambda i: (0, 0)),                       # LN params
        ],
        out_specs=pl.BlockSpec((bb, 1, 1), lambda i: (i, 0, 0)),
        compiler_params=pltpu.CompilerParams(
            dimension_semantics=("parallel",)),   # v7x: batch blocks across 2 TCs
        cost_estimate=pl.CostEstimate(flops=flops,
                                      transcendentals=transcendentals,
                                      bytes_accessed=bytes_accessed),
    )(h, kmask, lab_full, lmask_full,
      w["wq_h"], w["wk_h"], w["wv_h"], w["wo_h"],
      w["w1"], w["w2"], w["lm"], w["ln"])

    seq_log_prob = out.reshape(batch["targets"].shape[0], -1)
    predictions = jnp.argmax(seq_log_prob, axis=-1)
    return predictions, seq_log_prob


def decoder_model_forward_reference(params, batch):
    """Pure-JAX f32 reference of the same synthetic model + scoring."""
    input_ids = batch["input_ids"]
    labels = batch["labels"]
    _, prefix_length = input_ids.shape

    ids = jnp.concatenate([input_ids, labels], axis=-1)
    mask = jnp.concatenate(
        [batch["attention_mask"], batch["labels_attention_mask"]], axis=-1)
    position_ids = jnp.cumsum(mask.astype(jnp.int32), axis=-1) - 1
    B, L = ids.shape

    h = params["tok_emb"][ids] + params["pos_emb"][
        jnp.clip(position_ids, 0, MAX_POS - 1)]

    def ln_(x, g, b, eps=1e-5):
        mu = jnp.mean(x, axis=-1, keepdims=True)
        var = jnp.var(x, axis=-1, keepdims=True)
        return (x - mu) * lax.rsqrt(var + eps) * g + b

    x = ln_(h, params["ln1_g"], params["ln1_b"])
    proj = lambda a, w: jnp.einsum("bld,df->blf", a, w)
    q = proj(x, params["wq"]).reshape(B, L, NUM_HEADS, HEAD_DIM).transpose(0, 2, 1, 3)
    k = proj(x, params["wk"]).reshape(B, L, NUM_HEADS, HEAD_DIM).transpose(0, 2, 1, 3)
    v = proj(x, params["wv"]).reshape(B, L, NUM_HEADS, HEAD_DIM).transpose(0, 2, 1, 3)
    causal = jnp.tril(jnp.ones((L, L), jnp.float32))
    visible = causal[None, :, :] * mask[:, None, :].astype(jnp.float32)
    bias = (1.0 - visible) * NEG_INF
    s = jnp.einsum("bhld,bhmd->bhlm", q, k) / (HEAD_DIM ** 0.5) + bias[:, None, :, :]
    p = jax.nn.softmax(s, axis=-1)
    attn = jnp.einsum("bhlm,bhmd->bhld", p, v).transpose(0, 2, 1, 3).reshape(B, L, HIDDEN)
    h = h + proj(attn, params["wo"])

    x = ln_(h, params["ln2_g"], params["ln2_b"])
    ff = jax.nn.gelu(proj(x, params["w1"]), approximate=True)
    h = h + jnp.einsum("blf,fd->bld", ff, params["w2"])

    x = ln_(h, params["lnf_g"], params["lnf_b"])
    logits = jnp.einsum("bld,vd->blv", x, params["tok_emb"])

    label_logits = logits[:, prefix_length - 1:-1, :]
    log_probs = jax.nn.log_softmax(label_logits, axis=-1)
    masked = batch["labels_attention_mask"].astype(jnp.float32)[..., None] * log_probs
    gathered = jnp.take_along_axis(masked, labels[..., None].astype(jnp.int32), axis=-1)
    seq_log_prob = jnp.sum(gathered[..., 0], axis=-1)
    seq_log_prob = seq_log_prob.reshape(batch["targets"].shape[0], -1)
    predictions = jnp.argmax(seq_log_prob, axis=-1)
    return predictions, seq_log_prob


# ---------------------------------------------------------------------------
if __name__ == "__main__":
    key = jax.random.PRNGKey(0)
    k_par, k_ids, k_lab = jax.random.split(key, 3)

    num_targets, num_choices = 2, 2
    B = num_targets * num_choices
    prefix_len, label_len = 8, 8

    params = init_params(k_par)

    input_ids = jax.random.randint(k_ids, (B, prefix_len), 1, VOCAB, dtype=jnp.int32)
    attention_mask = jnp.ones((B, prefix_len), jnp.int32)
    labels = jax.random.randint(k_lab, (B, label_len), 1, VOCAB, dtype=jnp.int32)
    labels_attention_mask = jnp.concatenate(
        [jnp.ones((B, 6), jnp.int32), jnp.zeros((B, 2), jnp.int32)], axis=-1)
    targets = jnp.arange(num_targets, dtype=jnp.int32)

    batch = {
        "input_ids": input_ids,
        "attention_mask": attention_mask,
        "labels": labels,
        "labels_attention_mask": labels_attention_mask,
        "targets": targets,
    }

    preds, seq_lp = decoder_model_forward_pallas(params, batch)
    preds, seq_lp = jax.block_until_ready((preds, seq_lp))

    # numerical sanity check against a pure-JAX f32 reference of the same model
    ref_preds, ref_lp = decoder_model_forward_reference(params, batch)
    assert seq_lp.shape == (num_targets, num_choices)
    assert preds.shape == (num_targets,)
    assert jnp.allclose(seq_lp, ref_lp, atol=1e-1, rtol=5e-2), (seq_lp, ref_lp)

    # TODO(synk): real HF AutoModelForCausalLM checkpoint weights are not loadable
    # here; a deterministic synthetic single-block causal LM is used instead.
    print("KERNEL_OK")
</pallas_src>

<mosaic_0001>
module attributes {stable_mosaic.version = 11 : i64} {
  func.func @_fused_decoder_kernel(%arg0: i32, %arg1: memref<2x16x64xf32, #tpu.memory_space<vmem>>, %arg2: memref<2x1x16xf32, #tpu.memory_space<vmem>>, %arg3: memref<2x16x1xi32, #tpu.memory_space<vmem>>, %arg4: memref<2x16x1xf32, #tpu.memory_space<vmem>>, %arg5: memref<2x64x32xbf16, #tpu.memory_space<vmem>>, %arg6: memref<2x64x32xbf16, #tpu.memory_space<vmem>>, %arg7: memref<2x64x32xbf16, #tpu.memory_space<vmem>>, %arg8: memref<2x32x64xbf16, #tpu.memory_space<vmem>>, %arg9: memref<64x128xbf16, #tpu.memory_space<vmem>>, %arg10: memref<128x64xbf16, #tpu.memory_space<vmem>>, %arg11: memref<64x128xbf16, #tpu.memory_space<vmem>>, %arg12: memref<6x64xf32, #tpu.memory_space<vmem>>, %arg13: memref<2x1x1xf32, #tpu.memory_space<vmem>>) attributes {dimension_semantics = [#tpu.dimension_semantics<parallel>], iteration_bounds = array<i64: 2>, scalar_prefetch = 0 : i64, scratch_operands = 0 : i64, tpu.core_type = #tpu.core_type<tc>, window_params = [{transform_indices = @transform_0, window_bounds = array<i64: 2, 16, 64>}, {transform_indices = @transform_1, window_bounds = array<i64: 2, 1, 16>}, {transform_indices = @transform_2, window_bounds = array<i64: 2, 16, 1>}, {transform_indices = @transform_3, window_bounds = array<i64: 2, 16, 1>}, {pipeline_mode = #tpu.pipeline_mode<synchronous>, transform_indices = @transform_4, window_bounds = array<i64: 2, 64, 32>}, {pipeline_mode = #tpu.pipeline_mode<synchronous>, transform_indices = @transform_5, window_bounds = array<i64: 2, 64, 32>}, {pipeline_mode = #tpu.pipeline_mode<synchronous>, transform_indices = @transform_6, window_bounds = array<i64: 2, 64, 32>}, {pipeline_mode = #tpu.pipeline_mode<synchronous>, transform_indices = @transform_7, window_bounds = array<i64: 2, 32, 64>}, {pipeline_mode = #tpu.pipeline_mode<synchronous>, transform_indices = @transform_8, window_bounds = array<i64: 64, 128>}, {pipeline_mode = #tpu.pipeline_mode<synchronous>, transform_indices = @transform_9, window_bounds = array<i64: 128, 64>}, {pipeline_mode = #tpu.pipeline_mode<synchronous>, transform_indices = @transform_10, window_bounds = array<i64: 64, 128>}, {pipeline_mode = #tpu.pipeline_mode<synchronous>, transform_indices = @transform_11, window_bounds = array<i64: 6, 64>}, {transform_indices = @transform_12, window_bounds = array<i64: 2, 1, 1>}]} {
    %c0 = arith.constant 0 : index
    %c0_0 = arith.constant 0 : index
    %0 = vector.load %arg12[%c0, %c0_0] : memref<6x64xf32, #tpu.memory_space<vmem>>, vector<6x64xf32>
    %c0_1 = arith.constant 0 : index
    %c0_2 = arith.constant 0 : index
    %c0_3 = arith.constant 0 : index
    %1 = vector.load %arg1[%c0_1, %c0_2, %c0_3] : memref<2x16x64xf32, #tpu.memory_space<vmem>>, vector<2x16x64xf32>
    %2 = vector.shape_cast %1 : vector<2x16x64xf32> to vector<32x64xf32>
    %3 = tpu.iota {dimensions = array<i32: 0>} : vector<16x16xi32>
    %4 = tpu.iota {dimensions = array<i32: 1>} : vector<16x16xi32>
    %5 = arith.cmpi sle, %4, %3 : vector<16x16xi32>
    %6 = arith.extui %5 : vector<16x16xi1> to vector<16x16xi32>
    %7 = arith.sitofp %6 : vector<16x16xi32> to vector<16x16xf32>
    %8 = vector.shape_cast %7 : vector<16x16xf32> to vector<1x16x16xf32>
    %c0_4 = arith.constant 0 : index
    %c0_5 = arith.constant 0 : index
    %c0_6 = arith.constant 0 : index
    %9 = vector.load %arg2[%c0_4, %c0_5, %c0_6] : memref<2x1x16xf32, #tpu.memory_space<vmem>>, vector<2x1x16xf32>
    %10 = vector.broadcast %8 : vector<1x16x16xf32> to vector<2x16x16xf32>
    %11 = vector.broadcast %9 : vector<2x1x16xf32> to vector<2x16x16xf32>
    %12 = arith.mulf %10, %11 : vector<2x16x16xf32>
    %cst = arith.constant 1.000000e+00 : f32
    %13 = vector.broadcast %cst : f32 to vector<2x16x16xf32>
    %14 = arith.subf %13, %12 : vector<2x16x16xf32>
    %cst_7 = arith.constant -1.000000e+09 : f32
    %15 = vector.broadcast %cst_7 : f32 to vector<2x16x16xf32>
    %16 = arith.mulf %14, %15 : vector<2x16x16xf32>
    %17 = vector.extract_strided_slice %0 {offsets = [0, 0], sizes = [1, 64], strides = [1, 1]} : vector<6x64xf32> to vector<1x64xf32>
    %18 = vector.extract_strided_slice %0 {offsets = [1, 0], sizes = [1, 64], strides = [1, 1]} : vector<6x64xf32> to vector<1x64xf32>
    %cst_8 = arith.constant dense<0.000000e+00> : vector<32xf32>
    %19 = vector.multi_reduction <add>, %2, %cst_8 [1] : vector<32x64xf32> to vector<32xf32>
    %20 = vector.shape_cast %19 : vector<32xf32> to vector<32x1xf32>
    %cst_9 = arith.constant 6.400000e+01 : f32
    %21 = vector.broadcast %cst_9 : f32 to vector<32x1xf32>
    %22 = arith.divf %20, %21 : vector<32x1xf32>
    %23 = vector.broadcast %22 : vector<32x1xf32> to vector<32x64xf32>
    %24 = arith.subf %2, %23 : vector<32x64xf32>
    %25 = arith.mulf %24, %24 : vector<32x64xf32>
    %cst_10 = arith.constant dense<0.000000e+00> : vector<32xf32>
    %26 = vector.multi_reduction <add>, %25, %cst_10 [1] : vector<32x64xf32> to vector<32xf32>
    %27 = vector.shape_cast %26 : vector<32xf32> to vector<32x1xf32>
    %cst_11 = arith.constant 6.400000e+01 : f32
    %28 = vector.broadcast %cst_11 : f32 to vector<32x1xf32>
    %29 = arith.divf %27, %28 : vector<32x1xf32>
    %cst_12 = arith.constant 9.99999974E-6 : f32
    %30 = vector.broadcast %cst_12 : f32 to vector<32x1xf32>
    %31 = arith.addf %29, %30 : vector<32x1xf32>
    %32 = math.rsqrt %31 : vector<32x1xf32>
    %33 = vector.broadcast %32 : vector<32x1xf32> to vector<32x64xf32>
    %34 = arith.mulf %24, %33 : vector<32x64xf32>
    %35 = vector.broadcast %17 : vector<1x64xf32> to vector<32x64xf32>
    %36 = arith.mulf %34, %35 : vector<32x64xf32>
    %37 = vector.broadcast %18 : vector<1x64xf32> to vector<32x64xf32>
    %38 = arith.addf %36, %37 : vector<32x64xf32>
    %39 = arith.truncf %38 : vector<32x64xf32> to vector<32x64xbf16>
    %cst_13 = arith.constant 0.000000e+00 : f32
    %40 = vector.broadcast %cst_13 : f32 to vector<32x64xf32>
    %c0_14 = arith.constant 0 : index
    %c0_15 = arith.constant 0 : index
    %c0_16 = arith.constant 0 : index
    %41 = vector.load %arg5[%c0_14, %c0_15, %c0_16] : memref<2x64x32xbf16, #tpu.memory_space<vmem>>, vector<1x64x32xbf16>
    %42 = vector.shape_cast %41 : vector<1x64x32xbf16> to vector<64x32xbf16>
    %cst_17 = arith.constant dense<0.000000e+00> : vector<32x32xf32>
    %43 = tpu.matmul %39, %42, %cst_17 {dimension_numbers = #tpu.dot_dimension_numbers<[1], [0], [0], [1], [0, 0, 1, 1], [], []>} : vector<32x64xbf16>, vector<64x32xbf16>, vector<32x32xf32> -> vector<32x32xf32>
    %c0_18 = arith.constant 0 : index
    %c0_19 = arith.constant 0 : index
    %c0_20 = arith.constant 0 : index
    %44 = vector.load %arg6[%c0_18, %c0_19, %c0_20] : memref<2x64x32xbf16, #tpu.memory_space<vmem>>, vector<1x64x32xbf16>
    %45 = vector.shape_cast %44 : vector<1x64x32xbf16> to vector<64x32xbf16>
    %cst_21 = arith.constant dense<0.000000e+00> : vector<32x32xf32>
    %46 = tpu.matmul %39, %45, %cst_21 {dimension_numbers = #tpu.dot_dimension_numbers<[1], [0], [0], [1], [0, 0, 1, 1], [], []>} : vector<32x64xbf16>, vector<64x32xbf16>, vector<32x32xf32> -> vector<32x32xf32>
    %c0_22 = arith.constant 0 : index
    %c0_23 = arith.constant 0 : index
    %c0_24 = arith.constant 0 : index
    %47 = vector.load %arg7[%c0_22, %c0_23, %c0_24] : memref<2x64x32xbf16, #tpu.memory_space<vmem>>, vector<1x64x32xbf16>
    %48 = vector.shape_cast %47 : vector<1x64x32xbf16> to vector<64x32xbf16>
    %cst_25 = arith.constant dense<0.000000e+00> : vector<32x32xf32>
    %49 = tpu.matmul %39, %48, %cst_25 {dimension_numbers = #tpu.dot_dimension_numbers<[1], [0], [0], [1], [0, 0, 1, 1], [], []>} : vector<32x64xbf16>, vector<64x32xbf16>, vector<32x32xf32> -> vector<32x32xf32>
    %50 = vector.shape_cast %43 : vector<32x32xf32> to vector<2x16x32xf32>
    %51 = arith.truncf %50 : vector<2x16x32xf32> to vector<2x16x32xbf16>
    %52 = vector.shape_cast %46 : vector<32x32xf32> to vector<2x16x32xf32>
    %53 = arith.truncf %52 : vector<2x16x32xf32> to vector<2x16x32xbf16>
    %54 = vector.shape_cast %49 : vector<32x32xf32> to vector<2x16x32xf32>
    %55 = arith.truncf %54 : vector<2x16x32xf32> to vector<2x16x32xbf16>
    "tpu.trace_start"() <{level = 10 : i32, message = "bqd,bkd->bqk"}> : () -> ()
    %cst_26 = arith.constant dense<0.000000e+00> : vector<2x16x16xf32>
    %56 = tpu.matmul %51, %53, %cst_26 {dimension_numbers = #tpu.dot_dimension_numbers<[2], [2], [1], [1], [0, 0, 0, 1, 1, 1], [0], [0]>} : vector<2x16x32xbf16>, vector<2x16x32xbf16>, vector<2x16x16xf32> -> vector<2x16x16xf32>
    "tpu.trace_stop"() : () -> ()
    %cst_27 = arith.constant 0.176776692 : f32
    %57 = vector.broadcast %cst_27 : f32 to vector<2x16x16xf32>
    %58 = arith.mulf %56, %57 : vector<2x16x16xf32>
    %59 = arith.addf %58, %16 : vector<2x16x16xf32>
    %cst_28 = arith.constant dense<0xFF800000> : vector<2x16xf32>
    %60 = vector.multi_reduction <maximumf>, %59, %cst_28 [2] : vector<2x16x16xf32> to vector<2x16xf32>
    %61 = vector.shape_cast %60 : vector<2x16xf32> to vector<2x16x1xf32>
    %62 = vector.broadcast %61 : vector<2x16x1xf32> to vector<2x16x16xf32>
    %63 = arith.subf %59, %62 : vector<2x16x16xf32>
    %64 = math.exp %63 : vector<2x16x16xf32>
    %cst_29 = arith.constant dense<0.000000e+00> : vector<2x16xf32>
    %65 = vector.multi_reduction <add>, %64, %cst_29 [2] : vector<2x16x16xf32> to vector<2x16xf32>
    %66 = vector.shape_cast %65 : vector<2x16xf32> to vector<2x16x1xf32>
    %cst_30 = arith.constant 9.99999968E-21 : f32
    %67 = vector.broadcast %cst_30 : f32 to vector<2x16x1xf32>
    %68 = arith.maximumf %66, %67 : vector<2x16x1xf32>
    %69 = tpu.reciprocal %68 {approx = true} : vector<2x16x1xf32> -> vector<2x16x1xf32>
    %70 = vector.broadcast %69 : vector<2x16x1xf32> to vector<2x16x16xf32>
    %71 = arith.mulf %64, %70 : vector<2x16x16xf32>
    %72 = arith.truncf %71 : vector<2x16x16xf32> to vector<2x16x16xbf16>
    "tpu.trace_start"() <{level = 10 : i32, message = "bqk,bkd->bqd"}> : () -> ()
    %cst_31 = arith.constant dense<0.000000e+00> : vector<2x16x32xf32>
    %73 = tpu.matmul %72, %55, %cst_31 {dimension_numbers = #tpu.dot_dimension_numbers<[2], [1], [1], [2], [0, 0, 0, 1, 1, 2], [0], [0]>} : vector<2x16x16xbf16>, vector<2x16x32xbf16>, vector<2x16x32xf32> -> vector<2x16x32xf32>
    "tpu.trace_stop"() : () -> ()
    %74 = vector.shape_cast %73 : vector<2x16x32xf32> to vector<32x32xf32>
    %75 = arith.truncf %74 : vector<32x32xf32> to vector<32x32xbf16>
    %c0_32 = arith.constant 0 : index
    %c0_33 = arith.constant 0 : index
    %c0_34 = arith.constant 0 : index
    %76 = vector.load %arg8[%c0_32, %c0_33, %c0_34] : memref<2x32x64xbf16, #tpu.memory_space<vmem>>, vector<1x32x64xbf16>
    %77 = vector.shape_cast %76 : vector<1x32x64xbf16> to vector<32x64xbf16>
    %cst_35 = arith.constant dense<0.000000e+00> : vector<32x64xf32>
    %78 = tpu.matmul %75, %77, %cst_35 {dimension_numbers = #tpu.dot_dimension_numbers<[1], [0], [0], [1], [0, 0, 1, 1], [], []>} : vector<32x32xbf16>, vector<32x64xbf16>, vector<32x64xf32> -> vector<32x64xf32>
    %79 = arith.addf %40, %78 : vector<32x64xf32>
    %c1 = arith.constant 1 : index
    %c0_36 = arith.constant 0 : index
    %c0_37 = arith.constant 0 : index
    %80 = vector.load %arg5[%c1, %c0_36, %c0_37] : memref<2x64x32xbf16, #tpu.memory_space<vmem>>, vector<1x64x32xbf16>
    %81 = vector.shape_cast %80 : vector<1x64x32xbf16> to vector<64x32xbf16>
    %cst_38 = arith.constant dense<0.000000e+00> : vector<32x32xf32>
    %82 = tpu.matmul %39, %81, %cst_38 {dimension_numbers = #tpu.dot_dimension_numbers<[1], [0], [0], [1], [0, 0, 1, 1], [], []>} : vector<32x64xbf16>, vector<64x32xbf16>, vector<32x32xf32> -> vector<32x32xf32>
    %c1_39 = arith.constant 1 : index
    %c0_40 = arith.constant 0 : index
    %c0_41 = arith.constant 0 : index
    %83 = vector.load %arg6[%c1_39, %c0_40, %c0_41] : memref<2x64x32xbf16, #tpu.memory_space<vmem>>, vector<1x64x32xbf16>
    %84 = vector.shape_cast %83 : vector<1x64x32xbf16> to vector<64x32xbf16>
    %cst_42 = arith.constant dense<0.000000e+00> : vector<32x32xf32>
    %85 = tpu.matmul %39, %84, %cst_42 {dimension_numbers = #tpu.dot_dimension_numbers<[1], [0], [0], [1], [0, 0, 1, 1], [], []>} : vector<32x64xbf16>, vector<64x32xbf16>, vector<32x32xf32> -> vector<32x32xf32>
    %c1_43 = arith.constant 1 : index
    %c0_44 = arith.constant 0 : index
    %c0_45 = arith.constant 0 : index
    %86 = vector.load %arg7[%c1_43, %c0_44, %c0_45] : memref<2x64x32xbf16, #tpu.memory_space<vmem>>, vector<1x64x32xbf16>
    %87 = vector.shape_cast %86 : vector<1x64x32xbf16> to vector<64x32xbf16>
    %cst_46 = arith.constant dense<0.000000e+00> : vector<32x32xf32>
    %88 = tpu.matmul %39, %87, %cst_46 {dimension_numbers = #tpu.dot_dimension_numbers<[1], [0], [0], [1], [0, 0, 1, 1], [], []>} : vector<32x64xbf16>, vector<64x32xbf16>, vector<32x32xf32> -> vector<32x32xf32>
    %89 = vector.shape_cast %82 : vector<32x32xf32> to vector<2x16x32xf32>
    %90 = arith.truncf %89 : vector<2x16x32xf32> to vector<2x16x32xbf16>
    %91 = vector.shape_cast %85 : vector<32x32xf32> to vector<2x16x32xf32>
    %92 = arith.truncf %91 : vector<2x16x32xf32> to vector<2x16x32xbf16>
    %93 = vector.shape_cast %88 : vector<32x32xf32> to vector<2x16x32xf32>
    %94 = arith.truncf %93 : vector<2x16x32xf32> to vector<2x16x32xbf16>
    "tpu.trace_start"() <{level = 10 : i32, message = "bqd,bkd->bqk"}> : () -> ()
    %cst_47 = arith.constant dense<0.000000e+00> : vector<2x16x16xf32>
    %95 = tpu.matmul %90, %92, %cst_47 {dimension_numbers = #tpu.dot_dimension_numbers<[2], [2], [1], [1], [0, 0, 0, 1, 1, 1], [0], [0]>} : vector<2x16x32xbf16>, vector<2x16x32xbf16>, vector<2x16x16xf32> -> vector<2x16x16xf32>
    "tpu.trace_stop"() : () -> ()
    %cst_48 = arith.constant 0.176776692 : f32
    %96 = vector.broadcast %cst_48 : f32 to vector<2x16x16xf32>
    %97 = arith.mulf %95, %96 : vector<2x16x16xf32>
    %98 = arith.addf %97, %16 : vector<2x16x16xf32>
    %cst_49 = arith.constant dense<0xFF800000> : vector<2x16xf32>
    %99 = vector.multi_reduction <maximumf>, %98, %cst_49 [2] : vector<2x16x16xf32> to vector<2x16xf32>
    %100 = vector.shape_cast %99 : vector<2x16xf32> to vector<2x16x1xf32>
    %101 = vector.broadcast %100 : vector<2x16x1xf32> to vector<2x16x16xf32>
    %102 = arith.subf %98, %101 : vector<2x16x16xf32>
    %103 = math.exp %102 : vector<2x16x16xf32>
    %cst_50 = arith.constant dense<0.000000e+00> : vector<2x16xf32>
    %104 = vector.multi_reduction <add>, %103, %cst_50 [2] : vector<2x16x16xf32> to vector<2x16xf32>
    %105 = vector.shape_cast %104 : vector<2x16xf32> to vector<2x16x1xf32>
    %cst_51 = arith.constant 9.99999968E-21 : f32
    %106 = vector.broadcast %cst_51 : f32 to vector<2x16x1xf32>
    %107 = arith.maximumf %105, %106 : vector<2x16x1xf32>
    %108 = tpu.reciprocal %107 {approx = true} : vector<2x16x1xf32> -> vector<2x16x1xf32>
    %109 = vector.broadcast %108 : vector<2x16x1xf32> to vector<2x16x16xf32>
    %110 = arith.mulf %103, %109 : vector<2x16x16xf32>
    %111 = arith.truncf %110 : vector<2x16x16xf32> to vector<2x16x16xbf16>
    "tpu.trace_start"() <{level = 10 : i32, message = "bqk,bkd->bqd"}> : () -> ()
    %cst_52 = arith.constant dense<0.000000e+00> : vector<2x16x32xf32>
    %112 = tpu.matmul %111, %94, %cst_52 {dimension_numbers = #tpu.dot_dimension_numbers<[2], [1], [1], [2], [0, 0, 0, 1, 1, 2], [0], [0]>} : vector<2x16x16xbf16>, vector<2x16x32xbf16>, vector<2x16x32xf32> -> vector<2x16x32xf32>
    "tpu.trace_stop"() : () -> ()
    %113 = vector.shape_cast %112 : vector<2x16x32xf32> to vector<32x32xf32>
    %114 = arith.truncf %113 : vector<32x32xf32> to vector<32x32xbf16>
    %c1_53 = arith.constant 1 : index
    %c0_54 = arith.constant 0 : index
    %c0_55 = arith.constant 0 : index
    %115 = vector.load %arg8[%c1_53, %c0_54, %c0_55] : memref<2x32x64xbf16, #tpu.memory_space<vmem>>, vector<1x32x64xbf16>
    %116 = vector.shape_cast %115 : vector<1x32x64xbf16> to vector<32x64xbf16>
    %cst_56 = arith.constant dense<0.000000e+00> : vector<32x64xf32>
    %117 = tpu.matmul %114, %116, %cst_56 {dimension_numbers = #tpu.dot_dimension_numbers<[1], [0], [0], [1], [0, 0, 1, 1], [], []>} : vector<32x32xbf16>, vector<32x64xbf16>, vector<32x64xf32> -> vector<32x64xf32>
    %118 = arith.addf %79, %117 : vector<32x64xf32>
    %119 = arith.addf %2, %118 : vector<32x64xf32>
    %120 = vector.extract_strided_slice %0 {offsets = [2, 0], sizes = [1, 64], strides = [1, 1]} : vector<6x64xf32> to vector<1x64xf32>
    %121 = vector.extract_strided_slice %0 {offsets = [3, 0], sizes = [1, 64], strides = [1, 1]} : vector<6x64xf32> to vector<1x64xf32>
    %cst_57 = arith.constant dense<0.000000e+00> : vector<32xf32>
    %122 = vector.multi_reduction <add>, %119, %cst_57 [1] : vector<32x64xf32> to vector<32xf32>
    %123 = vector.shape_cast %122 : vector<32xf32> to vector<32x1xf32>
    %cst_58 = arith.constant 6.400000e+01 : f32
    %124 = vector.broadcast %cst_58 : f32 to vector<32x1xf32>
    %125 = arith.divf %123, %124 : vector<32x1xf32>
    %126 = vector.broadcast %125 : vector<32x1xf32> to vector<32x64xf32>
    %127 = arith.subf %119, %126 : vector<32x64xf32>
    %128 = arith.mulf %127, %127 : vector<32x64xf32>
    %cst_59 = arith.constant dense<0.000000e+00> : vector<32xf32>
    %129 = vector.multi_reduction <add>, %128, %cst_59 [1] : vector<32x64xf32> to vector<32xf32>
    %130 = vector.shape_cast %129 : vector<32xf32> to vector<32x1xf32>
    %cst_60 = arith.constant 6.400000e+01 : f32
    %131 = vector.broadcast %cst_60 : f32 to vector<32x1xf32>
    %132 = arith.divf %130, %131 : vector<32x1xf32>
    %cst_61 = arith.constant 9.99999974E-6 : f32
    %133 = vector.broadcast %cst_61 : f32 to vector<32x1xf32>
    %134 = arith.addf %132, %133 : vector<32x1xf32>
    %135 = math.rsqrt %134 : vector<32x1xf32>
    %136 = vector.broadcast %135 : vector<32x1xf32> to vector<32x64xf32>
    %137 = arith.mulf %127, %136 : vector<32x64xf32>
    %138 = vector.broadcast %120 : vector<1x64xf32> to vector<32x64xf32>
    %139 = arith.mulf %137, %138 : vector<32x64xf32>
    %140 = vector.broadcast %121 : vector<1x64xf32> to vector<32x64xf32>
    %141 = arith.addf %139, %140 : vector<32x64xf32>
    %142 = arith.truncf %141 : vector<32x64xf32> to vector<32x64xbf16>
    %c0_62 = arith.constant 0 : index
    %c0_63 = arith.constant 0 : index
    %143 = vector.load %arg9[%c0_62, %c0_63] : memref<64x128xbf16, #tpu.memory_space<vmem>>, vector<64x128xbf16>
    %cst_64 = arith.constant dense<0.000000e+00> : vector<32x128xf32>
    %144 = tpu.matmul %142, %143, %cst_64 {dimension_numbers = #tpu.dot_dimension_numbers<[1], [0], [0], [1], [0, 0, 1, 1], [], []>} : vector<32x64xbf16>, vector<64x128xbf16>, vector<32x128xf32> -> vector<32x128xf32>
    %145 = arith.mulf %144, %144 : vector<32x128xf32>
    %146 = arith.mulf %144, %145 : vector<32x128xf32>
    %cst_65 = arith.constant 4.471500e-02 : f32
    %147 = vector.broadcast %cst_65 : f32 to vector<32x128xf32>
    %148 = arith.mulf %147, %146 : vector<32x128xf32>
    %149 = arith.addf %144, %148 : vector<32x128xf32>
    %cst_66 = arith.constant 0.797884583 : f32
    %150 = vector.broadcast %cst_66 : f32 to vector<32x128xf32>
    %151 = arith.mulf %150, %149 : vector<32x128xf32>
    %152 = math.tanh %151 : vector<32x128xf32>
    %cst_67 = arith.constant 1.000000e+00 : f32
    %153 = vector.broadcast %cst_67 : f32 to vector<32x128xf32>
    %154 = arith.addf %153, %152 : vector<32x128xf32>
    %cst_68 = arith.constant 5.000000e-01 : f32
    %155 = vector.broadcast %cst_68 : f32 to vector<32x128xf32>
    %156 = arith.mulf %155, %154 : vector<32x128xf32>
    %157 = arith.mulf %144, %156 : vector<32x128xf32>
    %158 = arith.truncf %157 : vector<32x128xf32> to vector<32x128xbf16>
    %c0_69 = arith.constant 0 : index
    %c0_70 = arith.constant 0 : index
    %159 = vector.load %arg10[%c0_69, %c0_70] : memref<128x64xbf16, #tpu.memory_space<vmem>>, vector<128x64xbf16>
    %cst_71 = arith.constant dense<0.000000e+00> : vector<32x64xf32>
    %160 = tpu.matmul %158, %159, %cst_71 {dimension_numbers = #tpu.dot_dimension_numbers<[1], [0], [0], [1], [0, 0, 1, 1], [], []>} : vector<32x128xbf16>, vector<128x64xbf16>, vector<32x64xf32> -> vector<32x64xf32>
    %161 = arith.addf %119, %160 : vector<32x64xf32>
    %162 = vector.extract_strided_slice %0 {offsets = [4, 0], sizes = [1, 64], strides = [1, 1]} : vector<6x64xf32> to vector<1x64xf32>
    %163 = vector.extract_strided_slice %0 {offsets = [5, 0], sizes = [1, 64], strides = [1, 1]} : vector<6x64xf32> to vector<1x64xf32>
    %cst_72 = arith.constant dense<0.000000e+00> : vector<32xf32>
    %164 = vector.multi_reduction <add>, %161, %cst_72 [1] : vector<32x64xf32> to vector<32xf32>
    %165 = vector.shape_cast %164 : vector<32xf32> to vector<32x1xf32>
    %cst_73 = arith.constant 6.400000e+01 : f32
    %166 = vector.broadcast %cst_73 : f32 to vector<32x1xf32>
    %167 = arith.divf %165, %166 : vector<32x1xf32>
    %168 = vector.broadcast %167 : vector<32x1xf32> to vector<32x64xf32>
    %169 = arith.subf %161, %168 : vector<32x64xf32>
    %170 = arith.mulf %169, %169 : vector<32x64xf32>
    %cst_74 = arith.constant dense<0.000000e+00> : vector<32xf32>
    %171 = vector.multi_reduction <add>, %170, %cst_74 [1] : vector<32x64xf32> to vector<32xf32>
    %172 = vector.shape_cast %171 : vector<32xf32> to vector<32x1xf32>
    %cst_75 = arith.constant 6.400000e+01 : f32
    %173 = vector.broadcast %cst_75 : f32 to vector<32x1xf32>
    %174 = arith.divf %172, %173 : vector<32x1xf32>
    %cst_76 = arith.constant 9.99999974E-6 : f32
    %175 = vector.broadcast %cst_76 : f32 to vector<32x1xf32>
    %176 = arith.addf %174, %175 : vector<32x1xf32>
    %177 = math.rsqrt %176 : vector<32x1xf32>
    %178 = vector.broadcast %177 : vector<32x1xf32> to vector<32x64xf32>
    %179 = arith.mulf %169, %178 : vector<32x64xf32>
    %180 = vector.broadcast %162 : vector<1x64xf32> to vector<32x64xf32>
    %181 = arith.mulf %179, %180 : vector<32x64xf32>
    %182 = vector.broadcast %163 : vector<1x64xf32> to vector<32x64xf32>
    %183 = arith.addf %181, %182 : vector<32x64xf32>
    %184 = arith.truncf %183 : vector<32x64xf32> to vector<32x64xbf16>
    %c0_77 = arith.constant 0 : index
    %c0_78 = arith.constant 0 : index
    %185 = vector.load %arg11[%c0_77, %c0_78] : memref<64x128xbf16, #tpu.memory_space<vmem>>, vector<64x128xbf16>
    %cst_79 = arith.constant dense<0.000000e+00> : vector<32x128xf32>
    %186 = tpu.matmul %184, %185, %cst_79 {dimension_numbers = #tpu.dot_dimension_numbers<[1], [0], [0], [1], [0, 0, 1, 1], [], []>} : vector<32x64xbf16>, vector<64x128xbf16>, vector<32x128xf32> -> vector<32x128xf32>
    %cst_80 = arith.constant dense<0xFF800000> : vector<32xf32>
    %187 = vector.multi_reduction <maximumf>, %186, %cst_80 [1] : vector<32x128xf32> to vector<32xf32>
    %188 = vector.shape_cast %187 : vector<32xf32> to vector<32x1xf32>
    %189 = vector.broadcast %188 : vector<32x1xf32> to vector<32x128xf32>
    %190 = arith.subf %186, %189 : vector<32x128xf32>
    %191 = math.exp %190 : vector<32x128xf32>
    %cst_81 = arith.constant dense<0.000000e+00> : vector<32xf32>
    %192 = vector.multi_reduction <add>, %191, %cst_81 [1] : vector<32x128xf32> to vector<32xf32>
    %193 = vector.shape_cast %192 : vector<32xf32> to vector<32x1xf32>
    %194 = math.log %193 : vector<32x1xf32>
    %c0_82 = arith.constant 0 : index
    %c0_83 = arith.constant 0 : index
    %c0_84 = arith.constant 0 : index
    %195 = vector.load %arg3[%c0_82, %c0_83, %c0_84] : memref<2x16x1xi32, #tpu.memory_space<vmem>>, vector<2x16x1xi32>
    %196 = vector.shape_cast %195 : vector<2x16x1xi32> to vector<32x1xi32>
    %c0_85 = arith.constant 0 : index
    %c0_86 = arith.constant 0 : index
    %c0_87 = arith.constant 0 : index
    %197 = vector.load %arg4[%c0_85, %c0_86, %c0_87] : memref<2x16x1xf32, #tpu.memory_space<vmem>>, vector<2x16x1xf32>
    %198 = vector.shape_cast %197 : vector<2x16x1xf32> to vector<32x1xf32>
    %199 = tpu.iota {dimensions = array<i32: 1>} : vector<32x128xi32>
    %200 = vector.broadcast %196 : vector<32x1xi32> to vector<32x128xi32>
    %201 = arith.cmpi eq, %199, %200 : vector<32x128xi32>
    %202 = arith.extui %201 : vector<32x128xi1> to vector<32x128xi32>
    %203 = arith.sitofp %202 : vector<32x128xi32> to vector<32x128xf32>
    %204 = arith.mulf %190, %203 : vector<32x128xf32>
    %cst_88 = arith.constant dense<0.000000e+00> : vector<32xf32>
    %205 = vector.multi_reduction <add>, %204, %cst_88 [1] : vector<32x128xf32> to vector<32xf32>
    %206 = vector.shape_cast %205 : vector<32xf32> to vector<32x1xf32>
    %207 = arith.subf %206, %194 : vector<32x1xf32>
    %208 = arith.mulf %207, %198 : vector<32x1xf32>
    %209 = vector.shape_cast %208 : vector<32x1xf32> to vector<2x16x1xf32>
    %cst_89 = arith.constant dense<0.000000e+00> : vector<2x1xf32>
    %210 = vector.multi_reduction <add>, %209, %cst_89 [1] : vector<2x16x1xf32> to vector<2x1xf32>
    %211 = vector.shape_cast %210 : vector<2x1xf32> to vector<2x1x1xf32>
    %c0_90 = arith.constant 0 : index
    %c0_91 = arith.constant 0 : index
    %c0_92 = arith.constant 0 : index
    %212 = vector.load %arg13[%c0_90, %c0_91, %c0_92] : memref<2x1x1xf32, #tpu.memory_space<vmem>>, vector<2x1x1xf32>
    tpu.vector_store %arg13[%c0_90, %c0_91, %c0_92], %211 {strides = array<i32>} : memref<2x1x1xf32, #tpu.memory_space<vmem>>, vector<2x1x1xf32>,
    return
  }
  func.func @transform_0(%arg0: i32) -> (i32, i32, i32) {
    %c0_i32 = arith.constant 0 : i32
    %c0_i32_0 = arith.constant 0 : i32
    %c0_i32_1 = arith.constant 0 : i32
    return %arg0, %c0_i32, %c0_i32_0 : i32, i32, i32
  }
  func.func @transform_1(%arg0: i32) -> (i32, i32, i32) {
    %c0_i32 = arith.constant 0 : i32
    %c0_i32_0 = arith.constant 0 : i32
    %c0_i32_1 = arith.constant 0 : i32
    return %arg0, %c0_i32, %c0_i32_0 : i32, i32, i32
  }
  func.func @transform_2(%arg0: i32) -> (i32, i32, i32) {
    %c0_i32 = arith.constant 0 : i32
    %c0_i32_0 = arith.constant 0 : i32
    %c0_i32_1 = arith.constant 0 : i32
    return %arg0, %c0_i32, %c0_i32_0 : i32, i32, i32
  }
  func.func @transform_3(%arg0: i32) -> (i32, i32, i32) {
    %c0_i32 = arith.constant 0 : i32
    %c0_i32_0 = arith.constant 0 : i32
    %c0_i32_1 = arith.constant 0 : i32
    return %arg0, %c0_i32, %c0_i32_0 : i32, i32, i32
  }
  func.func @transform_4(%arg0: i32) -> (i32, i32, i32) {
    %c0_i32 = arith.constant 0 : i32
    %c0_i32_0 = arith.constant 0 : i32
    %c0_i32_1 = arith.constant 0 : i32
    %c0_i32_2 = arith.constant 0 : i32
    return %c0_i32, %c0_i32_0, %c0_i32_1 : i32, i32, i32
  }
  func.func @transform_5(%arg0: i32) -> (i32, i32, i32) {
    %c0_i32 = arith.constant 0 : i32
    %c0_i32_0 = arith.constant 0 : i32
    %c0_i32_1 = arith.constant 0 : i32
    %c0_i32_2 = arith.constant 0 : i32
    return %c0_i32, %c0_i32_0, %c0_i32_1 : i32, i32, i32
  }
  func.func @transform_6(%arg0: i32) -> (i32, i32, i32) {
    %c0_i32 = arith.constant 0 : i32
    %c0_i32_0 = arith.constant 0 : i32
    %c0_i32_1 = arith.constant 0 : i32
    %c0_i32_2 = arith.constant 0 : i32
    return %c0_i32, %c0_i32_0, %c0_i32_1 : i32, i32, i32
  }
  func.func @transform_7(%arg0: i32) -> (i32, i32, i32) {
    %c0_i32 = arith.constant 0 : i32
    %c0_i32_0 = arith.constant 0 : i32
    %c0_i32_1 = arith.constant 0 : i32
    %c0_i32_2 = arith.constant 0 : i32
    return %c0_i32, %c0_i32_0, %c0_i32_1 : i32, i32, i32
  }
  func.func @transform_8(%arg0: i32) -> (i32, i32) {
    %c0_i32 = arith.constant 0 : i32
    %c0_i32_0 = arith.constant 0 : i32
    %c0_i32_1 = arith.constant 0 : i32
    return %c0_i32, %c0_i32_0 : i32, i32
  }
  func.func @transform_9(%arg0: i32) -> (i32, i32) {
    %c0_i32 = arith.constant 0 : i32
    %c0_i32_0 = arith.constant 0 : i32
    %c0_i32_1 = arith.constant 0 : i32
    return %c0_i32, %c0_i32_0 : i32, i32
  }
  func.func @transform_10(%arg0: i32) -> (i32, i32) {
    %c0_i32 = arith.constant 0 : i32
    %c0_i32_0 = arith.constant 0 : i32
    %c0_i32_1 = arith.constant 0 : i32
    return %c0_i32, %c0_i32_0 : i32, i32
  }
  func.func @transform_11(%arg0: i32) -> (i32, i32) {
    %c0_i32 = arith.constant 0 : i32
    %c0_i32_0 = arith.constant 0 : i32
    %c0_i32_1 = arith.constant 0 : i32
    return %c0_i32, %c0_i32_0 : i32, i32
  }
  func.func @transform_12(%arg0: i32) -> (i32, i32, i32) {
    %c0_i32 = arith.constant 0 : i32
    %c0_i32_0 = arith.constant 0 : i32
    %c0_i32_1 = arith.constant 0 : i32
    return %arg0, %c0_i32, %c0_i32_0 : i32, i32, i32
  }
}

</mosaic_0001>

<llo_original>
// kernel: tpu_custom_call.1
$region0: #{tpu_custom_call.1}
  #allocation0 [shape = 'u32[]', space=smem, size = 0x4, offset = 0x4, fixed_abs, tag = 'smem constant byte address 0x4 - core index']
  #allocation1 [shape = 'u32[144,128]{1,0:T(1,128)}', space=vmem, size = 0x12000, scoped, tag = 'internal scratch']
  %s0 = inlined_call_operand.vmem [shape: f32[4,16,64], index: 0, kind: input, shape index: {}]
  %s1 = inlined_call_operand.vmem [shape: f32[4,1,16], index: 1, kind: input, shape index: {}]
  %s2 = inlined_call_operand.vmem [shape: s32[4,16,1], index: 2, kind: input, shape index: {}]
  %s3 = inlined_call_operand.vmem [shape: f32[4,16,1], index: 3, kind: input, shape index: {}]
  %s4 = inlined_call_operand.vmem [shape: bf16[2,64,32], index: 4, kind: input, shape index: {}]
  %s5 = inlined_call_operand.vmem [shape: bf16[2,64,32], index: 5, kind: input, shape index: {}]
  %s6 = inlined_call_operand.vmem [shape: bf16[2,64,32], index: 6, kind: input, shape index: {}]
  %s7 = inlined_call_operand.vmem [shape: bf16[2,32,64], index: 7, kind: input, shape index: {}]
  %s8 = inlined_call_operand.vmem [shape: bf16[64,128], index: 8, kind: input, shape index: {}]
  %s9 = inlined_call_operand.vmem [shape: bf16[128,64], index: 9, kind: input, shape index: {}]
  %s10 = inlined_call_operand.vmem [shape: bf16[64,128], index: 10, kind: input, shape index: {}]
  %s11 = inlined_call_operand.vmem [shape: f32[6,64], index: 11, kind: input, shape index: {}]
  %s12 = inlined_call_operand.vmem [shape: f32[4,1,1], index: 12, kind: output, shape index: {}]
  %s13 = sld [smem:[#allocation0]]
  $region81: #{tpu_custom_call.1} parent=0
    _
  %s15 = ssub.s32 1, %s13
  %s16 = scalar_select 0, %s15, %s13
  loop: start=0, step=1, limit=4
  $region2: #{tpu_custom_call.1} parent=0 // loop_pre_header
    _
  $region3: #{tpu_custom_call.1} parent=0 // loop_header
    %s18 = sphi 0, %s22
    %p19 = scmp.ge.s32.totalorder %s18, 4
    %s28 = sphi 0, %s30
    %s31 = sphi 0, %s28
    %s32 = sphi 0, %s31
    %s48 = sphi 0, %s32
    %s54 = sphi 0, %s56
    %s57 = sphi 0, %s54
    %s58 = sphi 0, %s57
    %s74 = sphi 0, %s58
    %s80 = sphi 0, %s82
    %s83 = sphi 0, %s80
    %s84 = sphi 0, %s83
    %s100 = sphi 0, %s84
    %s106 = sphi 0, %s108
    %s109 = sphi 0, %s106
    %s110 = sphi 0, %s109
    %s126 = sphi 0, %s110
    %s130 = sphi 0, %s130
    %s132 = sphi 0, %s130
    %s133 = sphi 0, %s132
    %s147 = sphi 0, %s133
    %s151 = sphi 0, %s151
    %s153 = sphi 0, %s151
    %s154 = sphi 0, %s153
    %s168 = sphi 0, %s154
    %s172 = sphi 0, %s172
    %s174 = sphi 0, %s172
    %s175 = sphi 0, %s174
    %s189 = sphi 0, %s175
    %s193 = sphi 0, %s193
    %s195 = sphi 0, %s193
    %s196 = sphi 0, %s195
    %s210 = sphi 0, %s196
    %s214 = sphi 0, %s214
    %s216 = sphi 0, %s214
    %s217 = sphi 0, %s216
    %s231 = sphi 0, %s217
    %s235 = sphi 0, %s235
    %s237 = sphi 0, %s235
    %s238 = sphi 0, %s237
    %s252 = sphi 0, %s238
    %s256 = sphi 0, %s256
    %s258 = sphi 0, %s256
    %s259 = sphi 0, %s258
    %s273 = sphi 0, %s259
    %s277 = sphi 0, %s277
    %s279 = sphi 0, %s277
    %s280 = sphi 0, %s279
    %s294 = sphi 0, %s280
    %s300 = sphi 0, %s302
    %s303 = sphi 0, %s300
    %s304 = sphi 0, %s303
    %s320 = sphi 0, %s304
  $region4: #{tpu_custom_call.1} parent=0 // loop_header_branch
    %21 = sbr.rel (%p19) target = $region8
  $region5: #{tpu_custom_call.1} parent=0 // loop_body
    %s23 = ssub.s32 %s18, 1
    %s24 = ssub.s32 %s18, 2
    %s25 = sadd.s32 %s18, 1
    %s26 = ssub.s32 %s18, %s25
    %p27 = scmp.eq.s32.totalorder %s26, 0
    %s29 = sadd.s32 %s28, 1
    %s30 = scalar_select %p27, %s28, %s29
    %p33 = pneg %p27
    %p34 = scmp.eq.s32.totalorder %s18, 1
    %p35 = por %p33, %p34
    %p36 = scmp.ne.s32.totalorder %s28, %s31
    %p37 = scmp.eq.s32.totalorder %s18, 0
    %p38 = por %p36, %p37
    %p39 = scmp.ne.s32.totalorder %s28, %s31
    %p40 = scmp.eq.s32.totalorder %s23, 1
    %p41 = por %p39, %p40
    %p42 = scmp.ne.s32.totalorder %s31, %s32
    %p43 = scmp.eq.s32.totalorder %s23, 0
    %p44 = por %p42, %p43
    %p45 = scmp.ne.s32.totalorder %s31, %s32
    %p46 = scmp.eq.s32.totalorder %s24, 1
    %p47 = por %p45, %p46
    %p49 = scmp.ne.s32.totalorder %s32, %s48
    %p50 = scmp.eq.s32.totalorder %s24, 0
    %p51 = por %p49, %p50
    %s52 = ssub.s32 %s18, %s25
    %p53 = scmp.eq.s32.totalorder %s52, 0
    %s55 = sadd.s32 %s54, 1
    %s56 = scalar_select %p53, %s54, %s55
    %p59 = pneg %p53
    %p60 = scmp.eq.s32.totalorder %s18, 1
    %p61 = por %p59, %p60
    %p62 = scmp.ne.s32.totalorder %s54, %s57
    %p63 = scmp.eq.s32.totalorder %s18, 0
    %p64 = por %p62, %p63
    %p65 = scmp.ne.s32.totalorder %s54, %s57
    %p66 = scmp.eq.s32.totalorder %s23, 1
    %p67 = por %p65, %p66
    %p68 = scmp.ne.s32.totalorder %s57, %s58
    %p69 = scmp.eq.s32.totalorder %s23, 0
    %p70 = por %p68, %p69
    %p71 = scmp.ne.s32.totalorder %s57, %s58
    %p72 = scmp.eq.s32.totalorder %s24, 1
    %p73 = por %p71, %p72
    %p75 = scmp.ne.s32.totalorder %s58, %s74
    %p76 = scmp.eq.s32.totalorder %s24, 0
    %p77 = por %p75, %p76
    %s78 = ssub.s32 %s18, %s25
    %p79 = scmp.eq.s32.totalorder %s78, 0
    %s81 = sadd.s32 %s80, 1
    %s82 = scalar_select %p79, %s80, %s81
    %p85 = pneg %p79
    %p86 = scmp.eq.s32.totalorder %s18, 1
    %p87 = por %p85, %p86
    %p88 = scmp.ne.s32.totalorder %s80, %s83
    %p89 = scmp.eq.s32.totalorder %s18, 0
    %p90 = por %p88, %p89
    %p91 = scmp.ne.s32.totalorder %s80, %s83
    %p92 = scmp.eq.s32.totalorder %s23, 1
    %p93 = por %p91, %p92
    %p94 = scmp.ne.s32.totalorder %s83, %s84
    %p95 = scmp.eq.s32.totalorder %s23, 0
    %p96 = por %p94, %p95
    %p97 = scmp.ne.s32.totalorder %s83, %s84
    %p98 = scmp.eq.s32.totalorder %s24, 1
    %p99 = por %p97, %p98
    %p101 = scmp.ne.s32.totalorder %s84, %s100
    %p102 = scmp.eq.s32.totalorder %s24, 0
    %p103 = por %p101, %p102
    %s104 = ssub.s32 %s18, %s25
    %p105 = scmp.eq.s32.totalorder %s104, 0
    %s107 = sadd.s32 %s106, 1
    %s108 = scalar_select %p105, %s106, %s107
    %p111 = pneg %p105
    %p112 = scmp.eq.s32.totalorder %s18, 1
    %p113 = por %p111, %p112
    %p114 = scmp.ne.s32.totalorder %s106, %s109
    %p115 = scmp.eq.s32.totalorder %s18, 0
    %p116 = por %p114, %p115
    %p117 = scmp.ne.s32.totalorder %s106, %s109
    %p118 = scmp.eq.s32.totalorder %s23, 1
    %p119 = por %p117, %p118
    %p120 = scmp.ne.s32.totalorder %s109, %s110
    %p121 = scmp.eq.s32.totalorder %s23, 0
    %p122 = por %p120, %p121
    %p123 = scmp.ne.s32.totalorder %s109, %s110
    %p124 = scmp.eq.s32.totalorder %s24, 1
    %p125 = por %p123, %p124
    %p127 = scmp.ne.s32.totalorder %s110, %s126
    %p128 = scmp.eq.s32.totalorder %s24, 0
    %p129 = por %p127, %p128
    %s131 = sadd.s32 %s130, 1
    %p134 = scmp.eq.s32.totalorder %s18, 1
    %p135 = scmp.ne.s32.totalorder %s130, %s132
    %p136 = scmp.eq.s32.totalorder %s18, 0
    %p137 = por %p135, %p136
    %p138 = scmp.ne.s32.totalorder %s130, %s132
    %p139 = scmp.eq.s32.totalorder %s23, 1
    %p140 = por %p138, %p139
    %p141 = scmp.ne.s32.totalorder %s132, %s133
    %p142 = scmp.eq.s32.totalorder %s23, 0
    %p143 = por %p141, %p142
    %p144 = scmp.ne.s32.totalorder %s132, %s133
    %p145 = scmp.eq.s32.totalorder %s24, 1
    %p146 = por %p144, %p145
    %p148 = scmp.ne.s32.totalorder %s133, %s147
    %p149 = scmp.eq.s32.totalorder %s24, 0
    %p150 = por %p148, %p149
    %s152 = sadd.s32 %s151, 1
    %p155 = scmp.eq.s32.totalorder %s18, 1
    %p156 = scmp.ne.s32.totalorder %s151, %s153
    %p157 = scmp.eq.s32.totalorder %s18, 0
    %p158 = por %p156, %p157
    %p159 = scmp.ne.s32.totalorder %s151, %s153
    %p160 = scmp.eq.s32.totalorder %s23, 1
    %p161 = por %p159, %p160
    %p162 = scmp.ne.s32.totalorder %s153, %s154
    %p163 = scmp.eq.s32.totalorder %s23, 0
    %p164 = por %p162, %p163
    %p165 = scmp.ne.s32.totalorder %s153, %s154
    %p166 = scmp.eq.s32.totalorder %s24, 1
    %p167 = por %p165, %p166
    %p169 = scmp.ne.s32.totalorder %s154, %s168
    %p170 = scmp.eq.s32.totalorder %s24, 0
    %p171 = por %p169, %p170
    %s173 = sadd.s32 %s172, 1
    %p176 = scmp.eq.s32.totalorder %s18, 1
    %p177 = scmp.ne.s32.totalorder %s172, %s174
    %p178 = scmp.eq.s32.totalorder %s18, 0
    %p179 = por %p177, %p178
    %p180 = scmp.ne.s32.totalorder %s172, %s174
    %p181 = scmp.eq.s32.totalorder %s23, 1
    %p182 = por %p180, %p181
    %p183 = scmp.ne.s32.totalorder %s174, %s175
    %p184 = scmp.eq.s32.totalorder %s23, 0
    %p185 = por %p183, %p184
    %p186 = scmp.ne.s32.totalorder %s174, %s175
    %p187 = scmp.eq.s32.totalorder %s24, 1
    %p188 = por %p186, %p187
    %p190 = scmp.ne.s32.totalorder %s175, %s189
    %p191 = scmp.eq.s32.totalorder %s24, 0
    %p192 = por %p190, %p191
    %s194 = sadd.s32 %s193, 1
    %p197 = scmp.eq.s32.totalorder %s18, 1
    %p198 = scmp.ne.s32.totalorder %s193, %s195
    %p199 = scmp.eq.s32.totalorder %s18, 0
    %p200 = por %p198, %p199
    %p201 = scmp.ne.s32.totalorder %s193, %s195
    %p202 = scmp.eq.s32.totalorder %s23, 1
    %p203 = por %p201, %p202
    %p204 = scmp.ne.s32.totalorder %s195, %s196
    %p205 = scmp.eq.s32.totalorder %s23, 0
    %p206 = por %p204, %p205
    %p207 = scmp.ne.s32.totalorder %s195, %s196
    %p208 = scmp.eq.s32.totalorder %s24, 1
    %p209 = por %p207, %p208
    %p211 = scmp.ne.s32.totalorder %s196, %s210
    %p212 = scmp.eq.s32.totalorder %s24, 0
    %p213 = por %p211, %p212
    %s215 = sadd.s32 %s214, 1
    %p218 = scmp.eq.s32.totalorder %s18, 1
    %p219 = scmp.ne.s32.totalorder %s214, %s216
    %p220 = scmp.eq.s32.totalorder %s18, 0
    %p221 = por %p219, %p220
    %p222 = scmp.ne.s32.totalorder %s214, %s216
    %p223 = scmp.eq.s32.totalorder %s23, 1
    %p224 = por %p222, %p223
    %p225 = scmp.ne.s32.totalorder %s216, %s217
    %p226 = scmp.eq.s32.totalorder %s23, 0
    %p227 = por %p225, %p226
    %p228 = scmp.ne.s32.totalorder %s216, %s217
    %p229 = scmp.eq.s32.totalorder %s24, 1
    %p230 = por %p228, %p229
    %p232 = scmp.ne.s32.totalorder %s217, %s231
    %p233 = scmp.eq.s32.totalorder %s24, 0
    %p234 = por %p232, %p233
    %s236 = sadd.s32 %s235, 1
    %p239 = scmp.eq.s32.totalorder %s18, 1
    %p240 = scmp.ne.s32.totalorder %s235, %s237
    %p241 = scmp.eq.s32.totalorder %s18, 0
    %p242 = por %p240, %p241
    %p243 = scmp.ne.s32.totalorder %s235, %s237
    %p244 = scmp.eq.s32.totalorder %s23, 1
    %p245 = por %p243, %p244
    %p246 = scmp.ne.s32.totalorder %s237, %s238
    %p247 = scmp.eq.s32.totalorder %s23, 0
    %p248 = por %p246, %p247
    %p249 = scmp.ne.s32.totalorder %s237, %s238
    %p250 = scmp.eq.s32.totalorder %s24, 1
    %p251 = por %p249, %p250
    %p253 = scmp.ne.s32.totalorder %s238, %s252
    %p254 = scmp.eq.s32.totalorder %s24, 0
    %p255 = por %p253, %p254
    %s257 = sadd.s32 %s256, 1
    %p260 = scmp.eq.s32.totalorder %s18, 1
    %p261 = scmp.ne.s32.totalorder %s256, %s258
    %p262 = scmp.eq.s32.totalorder %s18, 0
    %p263 = por %p261, %p262
    %p264 = scmp.ne.s32.totalorder %s256, %s258
    %p265 = scmp.eq.s32.totalorder %s23, 1
    %p266 = por %p264, %p265
    %p267 = scmp.ne.s32.totalorder %s258, %s259
    %p268 = scmp.eq.s32.totalorder %s23, 0
    %p269 = por %p267, %p268
    %p270 = scmp.ne.s32.totalorder %s258, %s259
    %p271 = scmp.eq.s32.totalorder %s24, 1
    %p272 = por %p270, %p271
    %p274 = scmp.ne.s32.totalorder %s259, %s273
    %p275 = scmp.eq.s32.totalorder %s24, 0
    %p276 = por %p274, %p275
    %s278 = sadd.s32 %s277, 1
    %p281 = scmp.eq.s32.totalorder %s18, 1
    %p282 = scmp.ne.s32.totalorder %s277, %s279
    %p283 = scmp.eq.s32.totalorder %s18, 0
    %p284 = por %p282, %p283
    %p285 = scmp.ne.s32.totalorder %s277, %s279
    %p286 = scmp.eq.s32.totalorder %s23, 1
    %p287 = por %p285, %p286
    %p288 = scmp.ne.s32.totalorder %s279, %s280
    %p289 = scmp.eq.s32.totalorder %s23, 0
    %p290 = por %p288, %p289
    %p291 = scmp.ne.s32.totalorder %s279, %s280
    %p292 = scmp.eq.s32.totalorder %s24, 1
    %p293 = por %p291, %p292
    %p295 = scmp.ne.s32.totalorder %s280, %s294
    %p296 = scmp.eq.s32.totalorder %s24, 0
    %p297 = por %p295, %p296
    %s298 = ssub.s32 %s18, %s25
    %p299 = scmp.eq.s32.totalorder %s298, 0
    %s301 = sadd.s32 %s300, 1
    %s302 = scalar_select %p299, %s300, %s301
    %p305 = pneg %p299
    %p306 = scmp.eq.s32.totalorder %s18, 1
    %p307 = por %p305, %p306
    %p308 = scmp.ne.s32.totalorder %s300, %s303
    %p309 = scmp.eq.s32.totalorder %s18, 0
    %p310 = por %p308, %p309
    %p311 = scmp.ne.s32.totalorder %s300, %s303
    %p312 = scmp.eq.s32.totalorder %s23, 1
    %p313 = por %p311, %p312
    %p314 = scmp.ne.s32.totalorder %s303, %s304
    %p315 = scmp.eq.s32.totalorder %s23, 0
    %p316 = por %p314, %p315
    %p317 = scmp.ne.s32.totalorder %s303, %s304
    %p318 = scmp.eq.s32.totalorder %s24, 1
    %p319 = por %p317, %p318
    %p321 = scmp.ne.s32.totalorder %s304, %s320
    %p322 = scmp.eq.s32.totalorder %s24, 0
    %p323 = por %p321, %p322
    %p324 = scmp.le.s32.totalorder 1, %s18
    %p325 = scmp.lt.s32.totalorder %s18, 3
    %p326 = pnand %p324, %p325
    %p327 = pneg %p326
    // Predicated region
    $region9: #{tpu_custom_call.1} parent=5 // pred_check
      _
    $region10: #{tpu_custom_call.1} parent=5 // pred_check_branch
      %329 = sbr.rel (%p326) target = $region12
    $region11: #{tpu_custom_call.1} parent=5 // pred_region
      %s330 = ssub.s32 %s18, 1
      // Predicated region
      $region13: #{tpu_custom_call.1} parent=11 // pred_check
        %p331 = pneg %p143
      $region14: #{tpu_custom_call.1} parent=11 // pred_check_branch
        %333 = sbr.rel (%p331) target = $region16
      $region15: #{tpu_custom_call.1} parent=11 // pred_region
        _
      $region16: #{tpu_custom_call.1} parent=11 // pred_fallthru
        _
      // Predicated region
      $region17: #{tpu_custom_call.1} parent=11 // pred_check
        %p334 = pneg %p164
      $region18: #{tpu_custom_call.1} parent=11 // pred_check_branch
        %336 = sbr.rel (%p334) target = $region20
      $region19: #{tpu_custom_call.1} parent=11 // pred_region
        _
      $region20: #{tpu_custom_call.1} parent=11 // pred_fallthru
        _
      // Predicated region
      $region21: #{tpu_custom_call.1} parent=11 // pred_check
        %p337 = pneg %p185
      $region22: #{tpu_custom_call.1} parent=11 // pred_check_branch
        %339 = sbr.rel (%p337) target = $region24
      $region23: #{tpu_custom_call.1} parent=11 // pred_region
        _
      $region24: #{tpu_custom_call.1} parent=11 // pred_fallthru
        _
      // Predicated region
      $region25: #{tpu_custom_call.1} parent=11 // pred_check
        %p340 = pneg %p206
      $region26: #{tpu_custom_call.1} parent=11 // pred_check_branch
        %342 = sbr.rel (%p340) target = $region28
      $region27: #{tpu_custom_call.1} parent=11 // pred_region
        _
      $region28: #{tpu_custom_call.1} parent=11 // pred_fallthru
        _
      // Predicated region
      $region29: #{tpu_custom_call.1} parent=11 // pred_check
        %p343 = pneg %p227
      $region30: #{tpu_custom_call.1} parent=11 // pred_check_branch
        %345 = sbr.rel (%p343) target = $region32
      $region31: #{tpu_custom_call.1} parent=11 // pred_region
        _
      $region32: #{tpu_custom_call.1} parent=11 // pred_fallthru
        _
      // Predicated region
      $region33: #{tpu_custom_call.1} parent=11 // pred_check
        %p346 = pneg %p248
      $region34: #{tpu_custom_call.1} parent=11 // pred_check_branch
        %348 = sbr.rel (%p346) target = $region36
      $region35: #{tpu_custom_call.1} parent=11 // pred_region
        _
      $region36: #{tpu_custom_call.1} parent=11 // pred_fallthru
        _
      // Predicated region
      $region37: #{tpu_custom_call.1} parent=11 // pred_check
        %p349 = pneg %p269
      $region38: #{tpu_custom_call.1} parent=11 // pred_check_branch
        %351 = sbr.rel (%p349) target = $region40
      $region39: #{tpu_custom_call.1} parent=11 // pred_region
        _
      $region40: #{tpu_custom_call.1} parent=11 // pred_fallthru
        _
      // Predicated region
      $region41: #{tpu_custom_call.1} parent=11 // pred_check
        %p352 = pneg %p290
      $region42: #{tpu_custom_call.1} parent=11 // pred_check_branch
        %354 = sbr.rel (%p352) target = $region44
      $region43: #{tpu_custom_call.1} parent=11 // pred_region
        _
      $region44: #{tpu_custom_call.1} parent=11 // pred_fallthru
        _
    $region12: #{tpu_custom_call.1} parent=5 // pred_fallthru
      _
    %p355 = scmp.lt.s32.totalorder %s18, 2
    // Predicated region
    $region45: #{tpu_custom_call.1} parent=5 // pred_check
      %p356 = pneg %p355
    $region46: #{tpu_custom_call.1} parent=5 // pred_check_branch
      %358 = sbr.rel (%p356) target = $region48
    $region47: #{tpu_custom_call.1} parent=5 // pred_region
      // Predicated region
      $region49: #{tpu_custom_call.1} parent=47 // pred_check
        %p359 = pneg %p38
      $region50: #{tpu_custom_call.1} parent=47 // pred_check_branch
        %361 = sbr.rel (%p359) target = $region52
      $region51: #{tpu_custom_call.1} parent=47 // pred_region
        %s362 = smul.u32 2, %s18
        %p363 = scmp.lt.s32.totalorder %s362, 3
        %s364 = scalar_select %p363, %s362, 3
        %s365 = smul.addr %s364, 2
        %s366 = smul.addr %s365, 8
        %s367 = scalar_lea.vmem %s0, %s366
        %s368 = smul.u32 2, %s18
      $region52: #{tpu_custom_call.1} parent=47 // pred_fallthru
        _
      // Predicated region
      $region53: #{tpu_custom_call.1} parent=47 // pred_check
        %p369 = pneg %p64
      $region54: #{tpu_custom_call.1} parent=47 // pred_check_branch
        %371 = sbr.rel (%p369) target = $region56
      $region55: #{tpu_custom_call.1} parent=47 // pred_region
        %s372 = smul.u32 2, %s18
        %p373 = scmp.lt.s32.totalorder %s372, 3
        %s374 = scalar_select %p373, %s372, 3
        %s375 = scalar_lea.vmem %s1, %s374
        %s376 = smul.u32 2, %s18
      $region56: #{tpu_custom_call.1} parent=47 // pred_fallthru
        _
      // Predicated region
      $region57: #{tpu_custom_call.1} parent=47 // pred_check
        %p377 = pneg %p90
      $region58: #{tpu_custom_call.1} parent=47 // pred_check_branch
        %379 = sbr.rel (%p377) target = $region60
      $region59: #{tpu_custom_call.1} parent=47 // pred_region
        %s380 = smul.u32 2, %s18
        %p381 = scmp.lt.s32.totalorder %s380, 3
        %s382 = scalar_select %p381, %s380, 3
        %s383 = smul.addr %s382, 2
        %s384 = smul.addr %s383, 8
        %s385 = scalar_lea.vmem %s2, %s384
        %s386 = smul.u32 2, %s18
      $region60: #{tpu_custom_call.1} parent=47 // pred_fallthru
        _
      // Predicated region
      $region61: #{tpu_custom_call.1} parent=47 // pred_check
        %p387 = pneg %p116
      $region62: #{tpu_custom_call.1} parent=47 // pred_check_branch
        %389 = sbr.rel (%p387) target = $region64
      $region63: #{tpu_custom_call.1} parent=47 // pred_region
        %s390 = smul.u32 2, %s18
        %p391 = scmp.lt.s32.totalorder %s390, 3
        %s392 = scalar_select %p391, %s390, 3
        %s393 = smul.addr %s392, 2
        %s394 = smul.addr %s393, 8
        %s395 = scalar_lea.vmem %s3, %s394
        %s396 = smul.u32 2, %s18
      $region64: #{tpu_custom_call.1} parent=47 // pred_fallthru
        _
    $region48: #{tpu_custom_call.1} parent=5 // pred_fallthru
      _
    %p397 = scmp.le.s32.totalorder 1, %s18
    %p398 = scmp.lt.s32.totalorder %s18, 3
    %p399 = pnand %p397, %p398
    %p400 = pneg %p399
    // Predicated region
    $region65: #{tpu_custom_call.1} parent=5 // pred_check
      _
    $region66: #{tpu_custom_call.1} parent=5 // pred_check_branch
      %402 = sbr.rel (%p399) target = $region68
    $region67: #{tpu_custom_call.1} parent=5 // pred_region
      %s403 = ssub.s32 %s18, 1
      %s404 = smul.u32 2, %s23
      %p405 = scmp.lt.s32.totalorder %s404, 3
      %s406 = scalar_select %p405, %s404, 3
      %s407 = smul.addr %s406, 2
      %s408 = smul.addr %s407, 8
      %s409 = scalar_lea.vmem %s0, %s408
      %p410 = pneg %p44
      %p411 = pneg %p41
      %s412 = smul.u32 2, %s23
      %p413 = scmp.lt.s32.totalorder %s412, 3
      %s414 = scalar_select %p413, %s412, 3
      %s415 = scalar_lea.vmem %s1, %s414
      %p416 = pneg %p70
      %p417 = pneg %p67
      %s418 = smul.u32 2, %s23
      %p419 = scmp.lt.s32.totalorder %s418, 3
      %s420 = scalar_select %p419, %s418, 3
      %s421 = smul.addr %s420, 2
      %s422 = smul.addr %s421, 8
      %s423 = scalar_lea.vmem %s2, %s422
      %p424 = pneg %p96
      %p425 = pneg %p93
      %s426 = smul.u32 2, %s23
      %p427 = scmp.lt.s32.totalorder %s426, 3
      %s428 = scalar_select %p427, %s426, 3
      %s429 = smul.addr %s428, 2
      %s430 = smul.addr %s429, 8
      %s431 = scalar_lea.vmem %s3, %s430
      %p432 = pneg %p122
      %p433 = pneg %p119
      %p434 = pneg %p143
      %p435 = pneg %p140
      %p436 = pneg %p164
      %p437 = pneg %p161
      %p438 = pneg %p185
      %p439 = pneg %p182
      %p440 = pneg %p206
      %p441 = pneg %p203
      %p442 = pneg %p227
      %p443 = pneg %p224
      %p444 = pneg %p248
      %p445 = pneg %p245
      %p446 = pneg %p269
      %p447 = pneg %p266
      %p448 = pneg %p290
      %p449 = pneg %p287
      %p450 = pneg %p316
      %p451 = pneg %p313
      %s452 = smul.u32 2, %s23
      %p453 = scmp.lt.s32.totalorder %s452, 3
      %s454 = scalar_select %p453, %s452, 3
      %s455 = scalar_lea.vmem %s12, %s454
      %s456 = smul.u32 2, %s23
      %p457 = scmp.lt.s32.totalorder %s456, 3
      %s458 = scalar_select %p457, %s456, 3
      %s459 = smul.addr %s458, 2
      %s460 = smul.addr %s459, 8
      %s461 = scalar_lea.vmem %s0, %s460
      %s462 = smul.u32 2, %s23
      %s463 = smul.u32 2, %s23
      %p464 = scmp.lt.s32.totalorder %s463, 3
      %s465 = scalar_select %p464, %s463, 3
      %s466 = scalar_lea.vmem %s1, %s465
      %s467 = smul.u32 2, %s23
      %s468 = smul.u32 2, %s23
      %p469 = scmp.lt.s32.totalorder %s468, 3
      %s470 = scalar_select %p469, %s468, 3
      %s471 = smul.addr %s470, 2
      %s472 = smul.addr %s471, 8
      %s473 = scalar_lea.vmem %s2, %s472
      %s474 = smul.u32 2, %s23
      %s475 = smul.u32 2, %s23
      %p476 = scmp.lt.s32.totalorder %s475, 3
      %s477 = scalar_select %p476, %s475, 3
      %s478 = smul.addr %s477, 2
      %s479 = smul.addr %s478, 8
      %s480 = scalar_lea.vmem %s3, %s479
      %s481 = smul.u32 2, %s23
      %s482 = smul.u32 2, %s23
      %p483 = scmp.lt.s32.totalorder %s482, 3
      %s484 = scalar_select %p483, %s482, 3
      %s485 = scalar_lea.vmem %s12, %s484
      %s486 = smul.u32 2, %s23
      %v488 = vld [vmem:[%s11] sm:$0x3f]
      %v489 = vld [vmem:[%s461] sm:$0xff]
      %v490 = vld [vmem:[%s461 + $0x8] sm:$0xff]
      %v491 = vld [vmem:[%s461 + $0x10] sm:$0xff]
      %v492 = vld [vmem:[%s461 + $0x18] sm:$0xff]
      %v493 = vlaneseq
      %v494 = vshrl.u32 %v493, 7
      %v495 = vadd.s32 %v494, 8
      %v496 = vlaneseq
      %v497 = vand.u32 %v496, 127
      %vm498 = vcmp.le.s32.totalorder %v497, %v494
      %vm499 = vcmp.le.s32.totalorder %v497, %v495
      %v500 = vsel %vm498, 1, 0
      %v501 = vsel %vm499, 1, 0
      %v502 = vcvt.s32.f32 %v500
      %v503 = vcvt.s32.f32 %v501
      %v504 = vld [vmem:[%s466] sm:$0x1]
      %v505 = vld [vmem:[%s466 + $0x1] sm:$0x1]
      %v508 = vlaneseq
      %v509 = vshrl.u32 %v508, 7
      %v510 = vsub.s32 0, %v509
      %v511 = vrot.slane %v504, %v510
      %v512 = vlaneseq
      %v513 = vshrl.u32 %v512, 7
      %v514 = vsub.s32 0, %v513
      %v515 = vrot.slane %v505, %v514
      %v518 = vmul.f32 %v502, %v511
      %v519 = vmul.f32 %v503, %v511
      %v520 = vmul.f32 %v502, %v515
      %v521 = vmul.f32 %v503, %v515
      %v522 = vsub.f32 1.0, %v518
      %v523 = vsub.f32 1.0, %v519
      %v524 = vsub.f32 1.0, %v520
      %v525 = vsub.f32 1.0, %v521
      %v526 = vmul.f32 %v522, -1e+09
      %v527 = vmul.f32 %v523, -1e+09
      %v528 = vmul.f32 %v524, -1e+09
      %v529 = vmul.f32 %v525, -1e+09
      %vm530 = vcmask 523264
      %v531 = vsel %vm530, %v489, 0.0
      %532 = vadd.xlane.f32.xlu0 %v531
      %v533 = vpop.xlane.xlu0 %532
      %v534 = vsel %vm530, %v490, 0.0
      %535 = vadd.xlane.f32.xlu0 %v534
      %v536 = vpop.xlane.xlu0 %535
      %v537 = vsel %vm530, %v491, 0.0
      %538 = vadd.xlane.f32.xlu0 %v537
      %v539 = vpop.xlane.xlu0 %538
      %v540 = vsel %vm530, %v492, 0.0
      %541 = vadd.xlane.f32.xlu0 %v540
      %v542 = vpop.xlane.xlu0 %541
      %v543 = vrcp.pop 64.0
      %v544 = vmul.f32 %v533, %v543
      %v545 = vmul.f32 %v536, %v543
      %v546 = vmul.f32 %v539, %v543
      %v547 = vmul.f32 %v542, %v543
      %v548 = vsub.f32 %v489, %v544
      %v549 = vsub.f32 %v490, %v545
      %v550 = vsub.f32 %v491, %v546
      %v551 = vsub.f32 %v492, %v547
      %v552 = vmul.f32 %v548, %v548
      %v553 = vmul.f32 %v549, %v549
      %v554 = vmul.f32 %v550, %v550
      %v555 = vmul.f32 %v551, %v551
      %v556 = vsel %vm530, %v552, 0.0
      %557 = vadd.xlane.f32.xlu0 %v556
      %v558 = vpop.xlane.xlu0 %557
      %v559 = vsel %vm530, %v553, 0.0
      %560 = vadd.xlane.f32.xlu0 %v559
      %v561 = vpop.xlane.xlu0 %560
      %v562 = vsel %vm530, %v554, 0.0
      %563 = vadd.xlane.f32.xlu0 %v562
      %v564 = vpop.xlane.xlu0 %563
      %v565 = vsel %vm530, %v555, 0.0
      %566 = vadd.xlane.f32.xlu0 %v565
      %v567 = vpop.xlane.xlu0 %566
      %v568 = vmul.f32 %v558, %v543
      %v569 = vmul.f32 %v561, %v543
      %v570 = vmul.f32 %v564, %v543
      %v571 = vmul.f32 %v567, %v543
      %v572 = vadd.f32 %v568, 1e-05
      %v573 = vadd.f32 %v569, 1e-05
      %v574 = vadd.f32 %v570, 1e-05
      %v575 = vadd.f32 %v571, 1e-05
      %v576 = vrsqrt.pop %v572
      %v577 = vrsqrt.pop %v573
      %v578 = vrsqrt.pop %v574
      %v579 = vrsqrt.pop %v575
      %v580 = vmul.f32 %v548, %v576
      %v581 = vmul.f32 %v549, %v577
      %v582 = vmul.f32 %v550, %v578
      %v583 = vmul.f32 %v551, %v579
      %v584 = vlaneseq
      %v585 = vshrl.u32 %v584, 7
      %v586 = vsub.s32 0, %v585
      %v587 = vrot.slane %v488, %v586
      %v588 = vmul.f32 %v580, %v587
      %v589 = vmul.f32 %v581, %v587
      %v590 = vmul.f32 %v582, %v587
      %v591 = vmul.f32 %v583, %v587
      %v592 = vlaneseq
      %v593 = vshrl.u32 %v592, 7
      %v594 = vsub.s32 1, %v593
      %v595 = vrot.slane %v488, %v594
      %v596 = vadd.f32 %v588, %v595
      %v597 = vadd.f32 %v589, %v595
      %v598 = vadd.f32 %v590, %v595
      %v599 = vadd.f32 %v591, %v595
      %v600 = vpack.c.bf16 %v597, %v596
      %v601 = vpack.c.bf16 %v599, %v598
      %v602 = vld [vmem:[%s4] sm:$0xf]
      %v603 = vld [vmem:[%s4 + $0x4] sm:$0xf]
      %v604 = vld [vmem:[%s4 + $0x8] sm:$0xf]
      %v605 = vld [vmem:[%s4 + $0xc] sm:$0xf]
      %v606 = vld [vmem:[%s4 + $0x10] sm:$0xf]
      %v607 = vld [vmem:[%s4 + $0x14] sm:$0xf]
      %v608 = vld [vmem:[%s4 + $0x18] sm:$0xf]
      %v609 = vld [vmem:[%s4 + $0x1c] sm:$0xf]
      %v618 = vunpack.c.l.b16 %v602
      %v619 = vunpack.c.l.b16 %v603
      %v620 = vunpack.c.l.b16 %v604
      %v621 = vunpack.c.l.b16 %v605
      %v622 = vunpack.c.l.b16 %v606
      %v623 = vunpack.c.l.b16 %v607
      %v624 = vunpack.c.l.b16 %v608
      %v625 = vunpack.c.l.b16 %v609
      %v626 = vpack.c.b16 %v619, %v618
      %v627 = vpack.c.b16 %v621, %v620
      %v628 = vpack.c.b16 %v623, %v622
      %v629 = vpack.c.b16 %v625, %v624
      %v635 = vsel %vm530, %v600, 0
      %v638 = vsel %vm530, %v601, 0
      %640 = vmatprep.subr.bf16.mxu0 0
      %641 = vmatpush1.bf16.msra.mxu0 %v626
      %642 = vmatprep.subr.bf16.mxu0 0
      %643 = vmatpush1.bf16.msra.mxu0 %v627
      %644 = vmatprep.subr.bf16.mxu0 0
      %645 = vmatpush1.bf16.msra.mxu0 %v628
      %646 = vmatprep.subr.bf16.mxu0 0
      %647 = vmatpush1.bf16.msra.mxu0 %v629
      %648 = vmatprep.subr.bf16.mxu0 0
      %649 = vmatpush1.bf16.msra.mxu0 0
      %650 = vmatprep.subr.bf16.mxu0 0
      %651 = vmatpush1.bf16.msra.mxu0 0
      %652 = vmatprep.subr.bf16.mxu0 0
      %653 = vmatpush1.bf16.msra.mxu0 0
      %654 = vmatprep.subr.bf16.mxu0 0
      %655 = vmatpush1.bf16.msra.mxu0 0
      %656 = vmatprep.subr.bf16.mxu0 0
      %657 = vmatpush1.bf16.msra.mxu0 0
      %658 = vmatprep.subr.bf16.mxu0 0
      %659 = vmatpush1.bf16.msra.mxu0 0
      %660 = vmatprep.subr.bf16.mxu0 0
      %661 = vmatpush1.bf16.msra.mxu0 0
      %662 = vmatprep.subr.bf16.mxu0 0
      %663 = vmatpush1.bf16.msra.mxu0 0
      %664 = vmatprep.subr.bf16.mxu0 0
      %665 = vmatpush1.bf16.msra.mxu0 0
      %666 = vmatprep.subr.bf16.mxu0 0
      %667 = vmatpush1.bf16.msra.mxu0 0
      %668 = vmatprep.subr.bf16.mxu0 0
      %669 = vmatpush1.bf16.msra.mxu0 0
      %670 = vmatprep.subr.bf16.mxu0 0
      %671 = vmatpush1.bf16.msra.mxu0 0
      %672 = vmatprep.mubr.bf16.mxu0 0
      %673 = vmatmul.mubr.bf16.gmra.mrb[0].mxu0 %v635
      %v674 = vpop.f32.mrb[0].mxu0
      %v675 = vadd.f32 0.0, %v674
      %v676 = vpop.f32.mrb[0].mxu0
      %v677 = vpop.f32.mrb[0].mxu0
      %v678 = vadd.f32 0.0, %v677
      %v679 = vpop.f32.mrb[0].mxu0
      %680 = vmatprep.mubr.bf16.mxu0 0
      %681 = vmatmul.mubr.bf16.gmra.mrb[0].mxu0 %v638
      %v682 = vpop.f32.mrb[0].mxu0
      %v683 = vadd.f32 0.0, %v682
      %v684 = vpop.f32.mrb[0].mxu0
      %v685 = vpop.f32.mrb[0].mxu0
      %v686 = vadd.f32 0.0, %v685
      %v687 = vpop.f32.mrb[0].mxu0
      %688 = vdwg.mxu0
      %v689 = vld [vmem:[%s5] sm:$0xf]
      %v690 = vld [vmem:[%s5 + $0x4] sm:$0xf]
      %v691 = vld [vmem:[%s5 + $0x8] sm:$0xf]
      %v692 = vld [vmem:[%s5 + $0xc] sm:$0xf]
      %v693 = vld [vmem:[%s5 + $0x10] sm:$0xf]
      %v694 = vld [vmem:[%s5 + $0x14] sm:$0xf]
      %v695 = vld [vmem:[%s5 + $0x18] sm:$0xf]
      %v696 = vld [vmem:[%s5 + $0x1c] sm:$0xf]
      %v705 = vunpack.c.l.b16 %v689
      %v706 = vunpack.c.l.b16 %v690
      %v707 = vunpack.c.l.b16 %v691
      %v708 = vunpack.c.l.b16 %v692
      %v709 = vunpack.c.l.b16 %v693
      %v710 = vunpack.c.l.b16 %v694
      %v711 = vunpack.c.l.b16 %v695
      %v712 = vunpack.c.l.b16 %v696
      %v713 = vpack.c.b16 %v706, %v705
      %v714 = vpack.c.b16 %v708, %v707
      %v715 = vpack.c.b16 %v710, %v709
      %v716 = vpack.c.b16 %v712, %v711
      %721 = vmatprep.subr.bf16.mxu0 0
      %722 = vmatpush1.bf16.msra.mxu0 %v713
      %723 = vmatprep.subr.bf16.mxu0 0
      %724 = vmatpush1.bf16.msra.mxu0 %v714
      %725 = vmatprep.subr.bf16.mxu0 0
      %726 = vmatpush1.bf16.msra.mxu0 %v715
      %727 = vmatprep.subr.bf16.mxu0 0
      %728 = vmatpush1.bf16.msra.mxu0 %v716
      %729 = vmatprep.subr.bf16.mxu0 0
      %730 = vmatpush1.bf16.msra.mxu0 0
      %731 = vmatprep.subr.bf16.mxu0 0
      %732 = vmatpush1.bf16.msra.mxu0 0
      %733 = vmatprep.subr.bf16.mxu0 0
      %734 = vmatpush1.bf16.msra.mxu0 0
      %735 = vmatprep.subr.bf16.mxu0 0
      %736 = vmatpush1.bf16.msra.mxu0 0
      %737 = vmatprep.subr.bf16.mxu0 0
      %738 = vmatpush1.bf16.msra.mxu0 0
      %739 = vmatprep.subr.bf16.mxu0 0
      %740 = vmatpush1.bf16.msra.mxu0 0
      %741 = vmatprep.subr.bf16.mxu0 0
      %742 = vmatpush1.bf16.msra.mxu0 0
      %743 = vmatprep.subr.bf16.mxu0 0
      %744 = vmatpush1.bf16.msra.mxu0 0
      %745 = vmatprep.subr.bf16.mxu0 0
      %746 = vmatpush1.bf16.msra.mxu0 0
      %747 = vmatprep.subr.bf16.mxu0 0
      %748 = vmatpush1.bf16.msra.mxu0 0
      %749 = vmatprep.subr.bf16.mxu0 0
      %750 = vmatpush1.bf16.msra.mxu0 0
      %751 = vmatprep.subr.bf16.mxu0 0
      %752 = vmatpush1.bf16.msra.mxu0 0
      %753 = vmatprep.mubr.bf16.mxu0 0
      %754 = vmatmul.mubr.bf16.gmra.mrb[0].mxu0 %v635
      %v755 = vpop.f32.mrb[0].mxu0
      %v756 = vadd.f32 0.0, %v755
      %v757 = vpop.f32.mrb[0].mxu0
      %v758 = vpop.f32.mrb[0].mxu0
      %v759 = vadd.f32 0.0, %v758
      %v760 = vpop.f32.mrb[0].mxu0
      %761 = vmatprep.mubr.bf16.mxu0 0
      %762 = vmatmul.mubr.bf16.gmra.mrb[0].mxu0 %v638
      %v763 = vpop.f32.mrb[0].mxu0
      %v764 = vadd.f32 0.0, %v763
      %v765 = vpop.f32.mrb[0].mxu0
      %v766 = vpop.f32.mrb[0].mxu0
      %v767 = vadd.f32 0.0, %v766
      %v768 = vpop.f32.mrb[0].mxu0
      %769 = vdwg.mxu0
      %v770 = vld [vmem:[%s6] sm:$0xf]
      %v771 = vld [vmem:[%s6 + $0x4] sm:$0xf]
      %v772 = vld [vmem:[%s6 + $0x8] sm:$0xf]
      %v773 = vld [vmem:[%s6 + $0xc] sm:$0xf]
      %v774 = vld [vmem:[%s6 + $0x10] sm:$0xf]
      %v775 = vld [vmem:[%s6 + $0x14] sm:$0xf]
      %v776 = vld [vmem:[%s6 + $0x18] sm:$0xf]
      %v777 = vld [vmem:[%s6 + $0x1c] sm:$0xf]
      %v786 = vunpack.c.l.b16 %v770
      %v787 = vunpack.c.l.b16 %v771
      %v788 = vunpack.c.l.b16 %v772
      %v789 = vunpack.c.l.b16 %v773
      %v790 = vunpack.c.l.b16 %v774
      %v791 = vunpack.c.l.b16 %v775
      %v792 = vunpack.c.l.b16 %v776
      %v793 = vunpack.c.l.b16 %v777
      %v794 = vpack.c.b16 %v787, %v786
      %v795 = vpack.c.b16 %v789, %v788
      %v796 = vpack.c.b16 %v791, %v790
      %v797 = vpack.c.b16 %v793, %v792
      %802 = vmatprep.subr.bf16.mxu0 0
      %803 = vmatpush1.bf16.msra.mxu0 %v794
      %804 = vmatprep.subr.bf16.mxu0 0
      %805 = vmatpush1.bf16.msra.mxu0 %v795
      %806 = vmatprep.subr.bf16.mxu0 0
      %807 = vmatpush1.bf16.msra.mxu0 %v796
      %808 = vmatprep.subr.bf16.mxu0 0
      %809 = vmatpush1.bf16.msra.mxu0 %v797
      %810 = vmatprep.subr.bf16.mxu0 0
      %811 = vmatpush1.bf16.msra.mxu0 0
      %812 = vmatprep.subr.bf16.mxu0 0
      %813 = vmatpush1.bf16.msra.mxu0 0
      %814 = vmatprep.subr.bf16.mxu0 0
      %815 = vmatpush1.bf16.msra.mxu0 0
      %816 = vmatprep.subr.bf16.mxu0 0
      %817 = vmatpush1.bf16.msra.mxu0 0
      %818 = vmatprep.subr.bf16.mxu0 0
      %819 = vmatpush1.bf16.msra.mxu0 0
      %820 = vmatprep.subr.bf16.mxu0 0
      %821 = vmatpush1.bf16.msra.mxu0 0
      %822 = vmatprep.subr.bf16.mxu0 0
      %823 = vmatpush1.bf16.msra.mxu0 0
      %824 = vmatprep.subr.bf16.mxu0 0
      %825 = vmatpush1.bf16.msra.mxu0 0
      %826 = vmatprep.subr.bf16.mxu0 0
      %827 = vmatpush1.bf16.msra.mxu0 0
      %828 = vmatprep.subr.bf16.mxu0 0
      %829 = vmatpush1.bf16.msra.mxu0 0
      %830 = vmatprep.subr.bf16.mxu0 0
      %831 = vmatpush1.bf16.msra.mxu0 0
      %832 = vmatprep.subr.bf16.mxu0 0
      %833 = vmatpush1.bf16.msra.mxu0 0
      %834 = vmatprep.mubr.bf16.mxu0 0
      %835 = vmatmul.mubr.bf16.gmra.mrb[0].mxu0 %v635
      %v836 = vpop.f32.mrb[0].mxu0
      %v837 = vadd.f32 0.0, %v836
      %v838 = vpop.f32.mrb[0].mxu0
      %v839 = vpop.f32.mrb[0].mxu0
      %v840 = vadd.f32 0.0, %v839
      %v841 = vpop.f32.mrb[0].mxu0
      %842 = vmatprep.mubr.bf16.mxu0 0
      %843 = vmatmul.mubr.bf16.gmra.mrb[0].mxu0 %v638
      %v844 = vpop.f32.mrb[0].mxu0
      %v845 = vadd.f32 0.0, %v844
      %v846 = vpop.f32.mrb[0].mxu0
      %v847 = vpop.f32.mrb[0].mxu0
      %v848 = vadd.f32 0.0, %v847
      %v849 = vpop.f32.mrb[0].mxu0
      %850 = vdwg.mxu0
      %v851 = vpack.c.bf16 %v678, %v675
      %v852 = vpack.c.bf16 %v686, %v683
      %v853 = vpack.c.bf16 %v759, %v756
      %v854 = vpack.c.bf16 %v767, %v764
      %v855 = vpack.c.bf16 %v840, %v837
      %v856 = vpack.c.bf16 %v848, %v845
      %vm857 = vcmask 261120
      %v859 = vsel %vm857, %v851, 0
      %v862 = vsel %vm857, %v853, 0
      %864 = vmatprep.subr.bf16.mxu0 0
      %865 = vmatpush1.bf16.xpose.msra.mxu0 %v862
      %866 = vmatprep.subr.bf16.mxu0 0
      %867 = vmatpush1.bf16.xpose.msra.mxu0 0
      %868 = vmatprep.subr.bf16.mxu0 0
      %869 = vmatpush1.bf16.xpose.msra.mxu0 0
      %870 = vmatprep.subr.bf16.mxu0 0
      %871 = vmatpush1.bf16.xpose.msra.mxu0 0
      %872 = vmatprep.subr.bf16.mxu0 0
      %873 = vmatpush1.bf16.xpose.msra.mxu0 0
      %874 = vmatprep.subr.bf16.mxu0 0
      %875 = vmatpush1.bf16.xpose.msra.mxu0 0
      %876 = vmatprep.subr.bf16.mxu0 0
      %877 = vmatpush1.bf16.xpose.msra.mxu0 0
      %878 = vmatprep.subr.bf16.mxu0 0
      %879 = vmatpush1.bf16.xpose.msra.mxu0 0
      %880 = vmatprep.subr.bf16.mxu0 0
      %881 = vmatpush1.bf16.xpose.msra.mxu0 0
      %882 = vmatprep.subr.bf16.mxu0 0
      %883 = vmatpush1.bf16.xpose.msra.mxu0 0
      %884 = vmatprep.subr.bf16.mxu0 0
      %885 = vmatpush1.bf16.xpose.msra.mxu0 0
      %886 = vmatprep.subr.bf16.mxu0 0
      %887 = vmatpush1.bf16.xpose.msra.mxu0 0
      %888 = vmatprep.subr.bf16.mxu0 0
      %889 = vmatpush1.bf16.xpose.msra.mxu0 0
      %890 = vmatprep.subr.bf16.mxu0 0
      %891 = vmatpush1.bf16.xpose.msra.mxu0 0
      %892 = vmatprep.subr.bf16.mxu0 0
      %893 = vmatpush1.bf16.xpose.msra.mxu0 0
      %894 = vmatprep.subr.bf16.mxu0 0
      %895 = vmatpush1.bf16.xpose.msra.mxu0 0
      %896 = vmatprep.mubr.bf16.mxu0 0
      %897 = vmatmul.mubr.bf16.gmra.mrb[0].mxu0 %v859
      %v898 = vpop.f32.mrb[0].mxu0
      %v899 = vadd.f32 0.0, %v898
      %v900 = vpop.f32.mrb[0].mxu0
      %v901 = vpop.f32.mrb[0].mxu0
      %v902 = vadd.f32 0.0, %v901
      %v903 = vpop.f32.mrb[0].mxu0
      %904 = vdwg.mxu0
      %v906 = vsel %vm857, %v852, 0
      %v909 = vsel %vm857, %v854, 0
      %911 = vmatprep.subr.bf16.mxu0 0
      %912 = vmatpush1.bf16.xpose.msra.mxu0 %v909
      %913 = vmatprep.subr.bf16.mxu0 0
      %914 = vmatpush1.bf16.xpose.msra.mxu0 0
      %915 = vmatprep.subr.bf16.mxu0 0
      %916 = vmatpush1.bf16.xpose.msra.mxu0 0
      %917 = vmatprep.subr.bf16.mxu0 0
      %918 = vmatpush1.bf16.xpose.msra.mxu0 0
      %919 = vmatprep.subr.bf16.mxu0 0
      %920 = vmatpush1.bf16.xpose.msra.mxu0 0
      %921 = vmatprep.subr.bf16.mxu0 0
      %922 = vmatpush1.bf16.xpose.msra.mxu0 0
      %923 = vmatprep.subr.bf16.mxu0 0
      %924 = vmatpush1.bf16.xpose.msra.mxu0 0
      %925 = vmatprep.subr.bf16.mxu0 0
      %926 = vmatpush1.bf16.xpose.msra.mxu0 0
      %927 = vmatprep.subr.bf16.mxu0 0
      %928 = vmatpush1.bf16.xpose.msra.mxu0 0
      %929 = vmatprep.subr.bf16.mxu0 0
      %930 = vmatpush1.bf16.xpose.msra.mxu0 0
      %931 = vmatprep.subr.bf16.mxu0 0
      %932 = vmatpush1.bf16.xpose.msra.mxu0 0
      %933 = vmatprep.subr.bf16.mxu0 0
      %934 = vmatpush1.bf16.xpose.msra.mxu0 0
      %935 = vmatprep.subr.bf16.mxu0 0
      %936 = vmatpush1.bf16.xpose.msra.mxu0 0
      %937 = vmatprep.subr.bf16.mxu0 0
      %938 = vmatpush1.bf16.xpose.msra.mxu0 0
      %939 = vmatprep.subr.bf16.mxu0 0
      %940 = vmatpush1.bf16.xpose.msra.mxu0 0
      %941 = vmatprep.subr.bf16.mxu0 0
      %942 = vmatpush1.bf16.xpose.msra.mxu0 0
      %943 = vmatprep.mubr.bf16.mxu0 0
      %944 = vmatmul.mubr.bf16.gmra.mrb[0].mxu0 %v906
      %v945 = vpop.f32.mrb[0].mxu0
      %v946 = vadd.f32 0.0, %v945
      %v947 = vpop.f32.mrb[0].mxu0
      %v948 = vpop.f32.mrb[0].mxu0
      %v949 = vadd.f32 0.0, %v948
      %v950 = vpop.f32.mrb[0].mxu0
      %951 = vdwg.mxu0
      %v952 = vmul.f32 %v899, 0.17677669
      %v953 = vmul.f32 %v902, 0.17677669
      %v954 = vmul.f32 %v946, 0.17677669
      %v955 = vmul.f32 %v949, 0.17677669
      %v956 = vadd.f32 %v952, %v526
      %v957 = vadd.f32 %v953, %v527
      %v958 = vadd.f32 %v954, %v528
      %v959 = vadd.f32 %v955, %v529
      %vm960 = vcmask 130048
      %v961 = vsel %vm960, %v956, -inf
      %962 = vmax.xlane.f32.xlu0 %v961
      %v963 = vpop.xlane.xlu0 %962
      %v964 = vsel %vm960, %v957, -inf
      %965 = vmax.xlane.f32.xlu0 %v964
      %v966 = vpop.xlane.xlu0 %965
      %v967 = vsel %vm960, %v958, -inf
      %968 = vmax.xlane.f32.xlu0 %v967
      %v969 = vpop.xlane.xlu0 %968
      %v970 = vsel %vm960, %v959, -inf
      %971 = vmax.xlane.f32.xlu0 %v970
      %v972 = vpop.xlane.xlu0 %971
      %v973 = vsub.f32 %v956, %v963
      %v974 = vsub.f32 %v957, %v966
      %v975 = vsub.f32 %v958, %v969
      %v976 = vsub.f32 %v959, %v972
      %v977 = vmul.f32 %v973, 1.442695
      %v978 = vpow.pop %v977
      %v979 = vmul.f32 %v974, 1.442695
      %v980 = vpow.pop %v979
      %v981 = vmul.f32 %v975, 1.442695
      %v982 = vpow.pop %v981
      %v983 = vmul.f32 %v976, 1.442695
      %v984 = vpow.pop %v983
      %v985 = vsel %vm960, %v978, 0.0
      %986 = vadd.xlane.f32.xlu0 %v985
      %v987 = vpop.xlane.xlu0 %986
      %v988 = vsel %vm960, %v980, 0.0
      %989 = vadd.xlane.f32.xlu0 %v988
      %v990 = vpop.xlane.xlu0 %989
      %v991 = vsel %vm960, %v982, 0.0
      %992 = vadd.xlane.f32.xlu0 %v991
      %v993 = vpop.xlane.xlu0 %992
      %v994 = vsel %vm960, %v984, 0.0
      %995 = vadd.xlane.f32.xlu0 %v994
      %v996 = vpop.xlane.xlu0 %995
      %v997 = vmax.f32 %v987, 1e-20
      %v998 = vmax.f32 %v990, 1e-20
      %v999 = vmax.f32 %v993, 1e-20
      %v1000 = vmax.f32 %v996, 1e-20
      %v1001 = vrcp.pop %v997
      %v1002 = vrcp.pop %v998
      %v1003 = vrcp.pop %v999
      %v1004 = vrcp.pop %v1000
      %v1005 = vmul.f32 %v978, %v1001
      %v1006 = vmul.f32 %v980, %v1002
      %v1007 = vmul.f32 %v982, %v1003
      %v1008 = vmul.f32 %v984, %v1004
      %v1009 = vpack.c.bf16 %v1006, %v1005
      %v1010 = vpack.c.bf16 %v1008, %v1007
      %v1012 = vsel %vm960, %v1009, 0
      %1014 = vmatprep.subr.bf16.mxu0 0
      %1015 = vmatpush1.bf16.msra.mxu0 %v855
      %1016 = vmatprep.subr.bf16.mxu0 0
      %1017 = vmatpush1.bf16.msra.mxu0 0
      %1018 = vmatprep.subr.bf16.mxu0 0
      %1019 = vmatpush1.bf16.msra.mxu0 0
      %1020 = vmatprep.subr.bf16.mxu0 0
      %1021 = vmatpush1.bf16.msra.mxu0 0
      %1022 = vmatprep.subr.bf16.mxu0 0
      %1023 = vmatpush1.bf16.msra.mxu0 0
      %1024 = vmatprep.subr.bf16.mxu0 0
      %1025 = vmatpush1.bf16.msra.mxu0 0
      %1026 = vmatprep.subr.bf16.mxu0 0
      %1027 = vmatpush1.bf16.msra.mxu0 0
      %1028 = vmatprep.subr.bf16.mxu0 0
      %1029 = vmatpush1.bf16.msra.mxu0 0
      %1030 = vmatprep.subr.bf16.mxu0 0
      %1031 = vmatpush1.bf16.msra.mxu0 0
      %1032 = vmatprep.subr.bf16.mxu0 0
      %1033 = vmatpush1.bf16.msra.mxu0 0
      %1034 = vmatprep.subr.bf16.mxu0 0
      %1035 = vmatpush1.bf16.msra.mxu0 0
      %1036 = vmatprep.subr.bf16.mxu0 0
      %1037 = vmatpush1.bf16.msra.mxu0 0
      %1038 = vmatprep.subr.bf16.mxu0 0
      %1039 = vmatpush1.bf16.msra.mxu0 0
      %1040 = vmatprep.subr.bf16.mxu0 0
      %1041 = vmatpush1.bf16.msra.mxu0 0
      %1042 = vmatprep.subr.bf16.mxu0 0
      %1043 = vmatpush1.bf16.msra.mxu0 0
      %1044 = vmatprep.subr.bf16.mxu0 0
      %1045 = vmatpush1.bf16.msra.mxu0 0
      %1046 = vmatprep.mubr.bf16.mxu0 0
      %1047 = vmatmul.mubr.bf16.gmra.mrb[0].mxu0 %v1012
      %v1048 = vpop.f32.mrb[0].mxu0
      %v1049 = vadd.f32 0.0, %v1048
      %v1050 = vpop.f32.mrb[0].mxu0
      %v1051 = vpop.f32.mrb[0].mxu0
      %v1052 = vadd.f32 0.0, %v1051
      %v1053 = vpop.f32.mrb[0].mxu0
      %1054 = vdwg.mxu0
      %v1056 = vsel %vm960, %v1010, 0
      %1058 = vmatprep.subr.bf16.mxu0 0
      %1059 = vmatpush1.bf16.msra.mxu0 %v856
      %1060 = vmatprep.subr.bf16.mxu0 0
      %1061 = vmatpush1.bf16.msra.mxu0 0
      %1062 = vmatprep.subr.bf16.mxu0 0
      %1063 = vmatpush1.bf16.msra.mxu0 0
      %1064 = vmatprep.subr.bf16.mxu0 0
      %1065 = vmatpush1.bf16.msra.mxu0 0
      %1066 = vmatprep.subr.bf16.mxu0 0
      %1067 = vmatpush1.bf16.msra.mxu0 0
      %1068 = vmatprep.subr.bf16.mxu0 0
      %1069 = vmatpush1.bf16.msra.mxu0 0
      %1070 = vmatprep.subr.bf16.mxu0 0
      %1071 = vmatpush1.bf16.msra.mxu0 0
      %1072 = vmatprep.subr.bf16.mxu0 0
      %1073 = vmatpush1.bf16.msra.mxu0 0
      %1074 = vmatprep.subr.bf16.mxu0 0
      %1075 = vmatpush1.bf16.msra.mxu0 0
      %1076 = vmatprep.subr.bf16.mxu0 0
      %1077 = vmatpush1.bf16.msra.mxu0 0
      %1078 = vmatprep.subr.bf16.mxu0 0
      %1079 = vmatpush1.bf16.msra.mxu0 0
      %1080 = vmatprep.subr.bf16.mxu0 0
      %1081 = vmatpush1.bf16.msra.mxu0 0
      %1082 = vmatprep.subr.bf16.mxu0 0
      %1083 = vmatpush1.bf16.msra.mxu0 0
      %1084 = vmatprep.subr.bf16.mxu0 0
      %1085 = vmatpush1.bf16.msra.mxu0 0
      %1086 = vmatprep.subr.bf16.mxu0 0
      %1087 = vmatpush1.bf16.msra.mxu0 0
      %1088 = vmatprep.subr.bf16.mxu0 0
      %1089 = vmatpush1.bf16.msra.mxu0 0
      %1090 = vmatprep.mubr.bf16.mxu0 0
      %1091 = vmatmul.mubr.bf16.gmra.mrb[0].mxu0 %v1056
      %v1092 = vpop.f32.mrb[0].mxu0
      %v1093 = vadd.f32 0.0, %v1092
      %v1094 = vpop.f32.mrb[0].mxu0
      %v1095 = vpop.f32.mrb[0].mxu0
      %v1096 = vadd.f32 0.0, %v1095
      %v1097 = vpop.f32.mrb[0].mxu0
      %1098 = vdwg.mxu0
      %v1099 = vpack.c.bf16 %v1052, %v1049
      %v1100 = vpack.c.bf16 %v1096, %v1093
      %v1101 = vld [vmem:[%s7] sm:$0xf]
      %v1102 = vld [vmem:[%s7 + $0x4] sm:$0xf]
      %v1103 = vld [vmem:[%s7 + $0x8] sm:$0xf]
      %v1104 = vld [vmem:[%s7 + $0xc] sm:$0xf]
      %s1105 = scalar_lea.vmem %s4, 32
      %v1106 = vld [vmem:[%s1105] sm:$0xf]
      %v1107 = vld [vmem:[%s1105 + $0x4] sm:$0xf]
      %v1108 = vld [vmem:[%s1105 + $0x8] sm:$0xf]
      %v1109 = vld [vmem:[%s1105 + $0xc] sm:$0xf]
      %v1110 = vld [vmem:[%s1105 + $0x10] sm:$0xf]
      %v1111 = vld [vmem:[%s1105 + $0x14] sm:$0xf]
      %v1112 = vld [vmem:[%s1105 + $0x18] sm:$0xf]
      %v1113 = vld [vmem:[%s1105 + $0x1c] sm:$0xf]
      %v1122 = vunpack.c.l.b16 %v1106
      %v1123 = vunpack.c.l.b16 %v1107
      %v1124 = vunpack.c.l.b16 %v1108
      %v1125 = vunpack.c.l.b16 %v1109
      %v1126 = vunpack.c.l.b16 %v1110
      %v1127 = vunpack.c.l.b16 %v1111
      %v1128 = vunpack.c.l.b16 %v1112
      %v1129 = vunpack.c.l.b16 %v1113
      %v1130 = vpack.c.b16 %v1123, %v1122
      %v1131 = vpack.c.b16 %v1125, %v1124
      %v1132 = vpack.c.b16 %v1127, %v1126
      %v1133 = vpack.c.b16 %v1129, %v1128
      %1138 = vmatprep.subr.bf16.mxu0 0
      %1139 = vmatpush1.bf16.msra.mxu0 %v1130
      %1140 = vmatprep.subr.bf16.mxu0 0
      %1141 = vmatpush1.bf16.msra.mxu0 %v1131
      %1142 = vmatprep.subr.bf16.mxu0 0
      %1143 = vmatpush1.bf16.msra.mxu0 %v1132
      %1144 = vmatprep.subr.bf16.mxu0 0
      %1145 = vmatpush1.bf16.msra.mxu0 %v1133
      %1146 = vmatprep.subr.bf16.mxu0 0
      %1147 = vmatpush1.bf16.msra.mxu0 0
      %1148 = vmatprep.subr.bf16.mxu0 0
      %1149 = vmatpush1.bf16.msra.mxu0 0
      %1150 = vmatprep.subr.bf16.mxu0 0
      %1151 = vmatpush1.bf16.msra.mxu0 0
      %1152 = vmatprep.subr.bf16.mxu0 0
      %1153 = vmatpush1.bf16.msra.mxu0 0
      %1154 = vmatprep.subr.bf16.mxu0 0
      %1155 = vmatpush1.bf16.msra.mxu0 0
      %1156 = vmatprep.subr.bf16.mxu0 0
      %1157 = vmatpush1.bf16.msra.mxu0 0
      %1158 = vmatprep.subr.bf16.mxu0 0
      %1159 = vmatpush1.bf16.msra.mxu0 0
      %1160 = vmatprep.subr.bf16.mxu0 0
      %1161 = vmatpush1.bf16.msra.mxu0 0
      %1162 = vmatprep.subr.bf16.mxu0 0
      %1163 = vmatpush1.bf16.msra.mxu0 0
      %1164 = vmatprep.subr.bf16.mxu0 0
      %1165 = vmatpush1.bf16.msra.mxu0 0
      %1166 = vmatprep.subr.bf16.mxu0 0
      %1167 = vmatpush1.bf16.msra.mxu0 0
      %1168 = vmatprep.subr.bf16.mxu0 0
      %1169 = vmatpush1.bf16.msra.mxu0 0
      %1170 = vmatprep.mubr.bf16.mxu0 0
      %1171 = vmatmul.mubr.bf16.gmra.mrb[0].mxu0 %v635
      %v1172 = vpop.f32.mrb[0].mxu0
      %v1173 = vadd.f32 0.0, %v1172
      %v1174 = vpop.f32.mrb[0].mxu0
      %v1175 = vpop.f32.mrb[0].mxu0
      %v1176 = vadd.f32 0.0, %v1175
      %v1177 = vpop.f32.mrb[0].mxu0
      %1178 = vmatprep.mubr.bf16.mxu0 0
      %1179 = vmatmul.mubr.bf16.gmra.mrb[0].mxu0 %v638
      %v1180 = vpop.f32.mrb[0].mxu0
      %v1181 = vadd.f32 0.0, %v1180
      %v1182 = vpop.f32.mrb[0].mxu0
      %v1183 = vpop.f32.mrb[0].mxu0
      %v1184 = vadd.f32 0.0, %v1183
      %v1185 = vpop.f32.mrb[0].mxu0
      %1186 = vdwg.mxu0
      %s1187 = scalar_lea.vmem %s5, 32
      %v1188 = vld [vmem:[%s1187] sm:$0xf]
      %v1189 = vld [vmem:[%s1187 + $0x4] sm:$0xf]
      %v1190 = vld [vmem:[%s1187 + $0x8] sm:$0xf]
      %v1191 = vld [vmem:[%s1187 + $0xc] sm:$0xf]
      %v1192 = vld [vmem:[%s1187 + $0x10] sm:$0xf]
      %v1193 = vld [vmem:[%s1187 + $0x14] sm:$0xf]
      %v1194 = vld [vmem:[%s1187 + $0x18] sm:$0xf]
      %v1195 = vld [vmem:[%s1187 + $0x1c] sm:$0xf]
      %v1204 = vunpack.c.l.b16 %v1188
      %v1205 = vunpack.c.l.b16 %v1189
      %v1206 = vunpack.c.l.b16 %v1190
      %v1207 = vunpack.c.l.b16 %v1191
      %v1208 = vunpack.c.l.b16 %v1192
      %v1209 = vunpack.c.l.b16 %v1193
      %v1210 = vunpack.c.l.b16 %v1194
      %v1211 = vunpack.c.l.b16 %v1195
      %v1212 = vpack.c.b16 %v1205, %v1204
      %v1213 = vpack.c.b16 %v1207, %v1206
      %v1214 = vpack.c.b16 %v1209, %v1208
      %v1215 = vpack.c.b16 %v1211, %v1210
      %1220 = vmatprep.subr.bf16.mxu0 0
      %1221 = vmatpush1.bf16.msra.mxu0 %v1212
      %1222 = vmatprep.subr.bf16.mxu0 0
      %1223 = vmatpush1.bf16.msra.mxu0 %v1213
      %1224 = vmatprep.subr.bf16.mxu0 0
      %1225 = vmatpush1.bf16.msra.mxu0 %v1214
      %1226 = vmatprep.subr.bf16.mxu0 0
      %1227 = vmatpush1.bf16.msra.mxu0 %v1215
      %1228 = vmatprep.subr.bf16.mxu0 0
      %1229 = vmatpush1.bf16.msra.mxu0 0
      %1230 = vmatprep.subr.bf16.mxu0 0
      %1231 = vmatpush1.bf16.msra.mxu0 0
      %1232 = vmatprep.subr.bf16.mxu0 0
      %1233 = vmatpush1.bf16.msra.mxu0 0
      %1234 = vmatprep.subr.bf16.mxu0 0
      %1235 = vmatpush1.bf16.msra.mxu0 0
      %1236 = vmatprep.subr.bf16.mxu0 0
      %1237 = vmatpush1.bf16.msra.mxu0 0
      %1238 = vmatprep.subr.bf16.mxu0 0
      %1239 = vmatpush1.bf16.msra.mxu0 0
      %1240 = vmatprep.subr.bf16.mxu0 0
      %1241 = vmatpush1.bf16.msra.mxu0 0
      %1242 = vmatprep.subr.bf16.mxu0 0
      %1243 = vmatpush1.bf16.msra.mxu0 0
      %1244 = vmatprep.subr.bf16.mxu0 0
      %1245 = vmatpush1.bf16.msra.mxu0 0
      %1246 = vmatprep.subr.bf16.mxu0 0
      %1247 = vmatpush1.bf16.msra.mxu0 0
      %1248 = vmatprep.subr.bf16.mxu0 0
      %1249 = vmatpush1.bf16.msra.mxu0 0
      %1250 = vmatprep.subr.bf16.mxu0 0
      %1251 = vmatpush1.bf16.msra.mxu0 0
      %1252 = vmatprep.mubr.bf16.mxu0 0
      %1253 = vmatmul.mubr.bf16.gmra.mrb[0].mxu0 %v635
      %v1254 = vpop.f32.mrb[0].mxu0
      %v1255 = vadd.f32 0.0, %v1254
      %v1256 = vpop.f32.mrb[0].mxu0
      %v1257 = vpop.f32.mrb[0].mxu0
      %v1258 = vadd.f32 0.0, %v1257
      %v1259 = vpop.f32.mrb[0].mxu0
      %1260 = vmatprep.mubr.bf16.mxu0 0
      %1261 = vmatmul.mubr.bf16.gmra.mrb[0].mxu0 %v638
      %v1262 = vpop.f32.mrb[0].mxu0
      %v1263 = vadd.f32 0.0, %v1262
      %v1264 = vpop.f32.mrb[0].mxu0
      %v1265 = vpop.f32.mrb[0].mxu0
      %v1266 = vadd.f32 0.0, %v1265
      %v1267 = vpop.f32.mrb[0].mxu0
      %1268 = vdwg.mxu0
      %s1269 = scalar_lea.vmem %s6, 32
      %v1270 = vld [vmem:[%s1269] sm:$0xf]
      %v1271 = vld [vmem:[%s1269 + $0x4] sm:$0xf]
      %v1272 = vld [vmem:[%s1269 + $0x8] sm:$0xf]
      %v1273 = vld [vmem:[%s1269 + $0xc] sm:$0xf]
      %v1274 = vld [vmem:[%s1269 + $0x10] sm:$0xf]
      %v1275 = vld [vmem:[%s1269 + $0x14] sm:$0xf]
      %v1276 = vld [vmem:[%s1269 + $0x18] sm:$0xf]
      %v1277 = vld [vmem:[%s1269 + $0x1c] sm:$0xf]
      %v1286 = vunpack.c.l.b16 %v1270
      %v1287 = vunpack.c.l.b16 %v1271
      %v1288 = vunpack.c.l.b16 %v1272
      %v1289 = vunpack.c.l.b16 %v1273
      %v1290 = vunpack.c.l.b16 %v1274
      %v1291 = vunpack.c.l.b16 %v1275
      %v1292 = vunpack.c.l.b16 %v1276
      %v1293 = vunpack.c.l.b16 %v1277
      %v1294 = vpack.c.b16 %v1287, %v1286
      %v1295 = vpack.c.b16 %v1289, %v1288
      %v1296 = vpack.c.b16 %v1291, %v1290
      %v1297 = vpack.c.b16 %v1293, %v1292
      %1302 = vmatprep.subr.bf16.mxu0 0
      %1303 = vmatpush1.bf16.msra.mxu0 %v1294
      %1304 = vmatprep.subr.bf16.mxu0 0
      %1305 = vmatpush1.bf16.msra.mxu0 %v1295
      %1306 = vmatprep.subr.bf16.mxu0 0
      %1307 = vmatpush1.bf16.msra.mxu0 %v1296
      %1308 = vmatprep.subr.bf16.mxu0 0
      %1309 = vmatpush1.bf16.msra.mxu0 %v1297
      %1310 = vmatprep.subr.bf16.mxu0 0
      %1311 = vmatpush1.bf16.msra.mxu0 0
      %1312 = vmatprep.subr.bf16.mxu0 0
      %1313 = vmatpush1.bf16.msra.mxu0 0
      %1314 = vmatprep.subr.bf16.mxu0 0
      %1315 = vmatpush1.bf16.msra.mxu0 0
      %1316 = vmatprep.subr.bf16.mxu0 0
      %1317 = vmatpush1.bf16.msra.mxu0 0
      %1318 = vmatprep.subr.bf16.mxu0 0
      %1319 = vmatpush1.bf16.msra.mxu0 0
      %1320 = vmatprep.subr.bf16.mxu0 0
      %1321 = vmatpush1.bf16.msra.mxu0 0
      %1322 = vmatprep.subr.bf16.mxu0 0
      %1323 = vmatpush1.bf16.msra.mxu0 0
      %1324 = vmatprep.subr.bf16.mxu0 0
      %1325 = vmatpush1.bf16.msra.mxu0 0
      %1326 = vmatprep.subr.bf16.mxu0 0
      %1327 = vmatpush1.bf16.msra.mxu0 0
      %1328 = vmatprep.subr.bf16.mxu0 0
      %1329 = vmatpush1.bf16.msra.mxu0 0
      %1330 = vmatprep.subr.bf16.mxu0 0
      %1331 = vmatpush1.bf16.msra.mxu0 0
      %1332 = vmatprep.subr.bf16.mxu0 0
      %1333 = vmatpush1.bf16.msra.mxu0 0
      %1334 = vmatprep.mubr.bf16.mxu0 0
      %1335 = vmatmul.mubr.bf16.gmra.mrb[0].mxu0 %v635
      %v1336 = vpop.f32.mrb[0].mxu0
      %v1337 = vadd.f32 0.0, %v1336
      %v1338 = vpop.f32.mrb[0].mxu0
      %v1339 = vpop.f32.mrb[0].mxu0
      %v1340 = vadd.f32 0.0, %v1339
      %v1341 = vpop.f32.mrb[0].mxu0
      %1342 = vmatprep.mubr.bf16.mxu0 0
      %1343 = vmatmul.mubr.bf16.gmra.mrb[0].mxu0 %v638
      %v1344 = vpop.f32.mrb[0].mxu0
      %v1345 = vadd.f32 0.0, %v1344
      %v1346 = vpop.f32.mrb[0].mxu0
      %v1347 = vpop.f32.mrb[0].mxu0
      %v1348 = vadd.f32 0.0, %v1347
      %v1349 = vpop.f32.mrb[0].mxu0
      %1350 = vdwg.mxu0
      %v1351 = vpack.c.bf16 %v1176, %v1173
      %v1352 = vpack.c.bf16 %v1184, %v1181
      %v1353 = vpack.c.bf16 %v1258, %v1255
      %v1354 = vpack.c.bf16 %v1266, %v1263
      %v1355 = vpack.c.bf16 %v1340, %v1337
      %v1356 = vpack.c.bf16 %v1348, %v1345
      %v1358 = vsel %vm857, %v1351, 0
      %v1361 = vsel %vm857, %v1353, 0
      %1363 = vmatprep.subr.bf16.mxu0 0
      %1364 = vmatpush1.bf16.xpose.msra.mxu0 %v1361
      %1365 = vmatprep.subr.bf16.mxu0 0
      %1366 = vmatpush1.bf16.xpose.msra.mxu0 0
      %1367 = vmatprep.subr.bf16.mxu0 0
      %1368 = vmatpush1.bf16.xpose.msra.mxu0 0
      %1369 = vmatprep.subr.bf16.mxu0 0
      %1370 = vmatpush1.bf16.xpose.msra.mxu0 0
      %1371 = vmatprep.subr.bf16.mxu0 0
      %1372 = vmatpush1.bf16.xpose.msra.mxu0 0
      %1373 = vmatprep.subr.bf16.mxu0 0
      %1374 = vmatpush1.bf16.xpose.msra.mxu0 0
      %1375 = vmatprep.subr.bf16.mxu0 0
      %1376 = vmatpush1.bf16.xpose.msra.mxu0 0
      %1377 = vmatprep.subr.bf16.mxu0 0
      %1378 = vmatpush1.bf16.xpose.msra.mxu0 0
      %1379 = vmatprep.subr.bf16.mxu0 0
      %1380 = vmatpush1.bf16.xpose.msra.mxu0 0
      %1381 = vmatprep.subr.bf16.mxu0 0
      %1382 = vmatpush1.bf16.xpose.msra.mxu0 0
      %1383 = vmatprep.subr.bf16.mxu0 0
      %1384 = vmatpush1.bf16.xpose.msra.mxu0 0
      %1385 = vmatprep.subr.bf16.mxu0 0
      %1386 = vmatpush1.bf16.xpose.msra.mxu0 0
      %1387 = vmatprep.subr.bf16.mxu0 0
      %1388 = vmatpush1.bf16.xpose.msra.mxu0 0
      %1389 = vmatprep.subr.bf16.mxu0 0
      %1390 = vmatpush1.bf16.xpose.msra.mxu0 0
      %1391 = vmatprep.subr.bf16.mxu0 0
      %1392 = vmatpush1.bf16.xpose.msra.mxu0 0
      %1393 = vmatprep.subr.bf16.mxu0 0
      %1394 = vmatpush1.bf16.xpose.msra.mxu0 0
      %1395 = vmatprep.mubr.bf16.mxu0 0
      %1396 = vmatmul.mubr.bf16.gmra.mrb[0].mxu0 %v1358
      %v1397 = vpop.f32.mrb[0].mxu0
      %v1398 = vadd.f32 0.0, %v1397
      %v1399 = vpop.f32.mrb[0].mxu0
      %v1400 = vpop.f32.mrb[0].mxu0
      %v1401 = vadd.f32 0.0, %v1400
      %v1402 = vpop.f32.mrb[0].mxu0
      %1403 = vdwg.mxu0
      %v1405 = vsel %vm857, %v1352, 0
      %v1408 = vsel %vm857, %v1354, 0
      %1410 = vmatprep.subr.bf16.mxu0 0
      %1411 = vmatpush1.bf16.xpose.msra.mxu0 %v1408
      %1412 = vmatprep.subr.bf16.mxu0 0
      %1413 = vmatpush1.bf16.xpose.msra.mxu0 0
      %1414 = vmatprep.subr.bf16.mxu0 0
      %1415 = vmatpush1.bf16.xpose.msra.mxu0 0
      %1416 = vmatprep.subr.bf16.mxu0 0
      %1417 = vmatpush1.bf16.xpose.msra.mxu0 0
      %1418 = vmatprep.subr.bf16.mxu0 0
      %1419 = vmatpush1.bf16.xpose.msra.mxu0 0
      %1420 = vmatprep.subr.bf16.mxu0 0
      %1421 = vmatpush1.bf16.xpose.msra.mxu0 0
      %1422 = vmatprep.subr.bf16.mxu0 0
      %1423 = vmatpush1.bf16.xpose.msra.mxu0 0
      %1424 = vmatprep.subr.bf16.mxu0 0
      %1425 = vmatpush1.bf16.xpose.msra.mxu0 0
      %1426 = vmatprep.subr.bf16.mxu0 0
      %1427 = vmatpush1.bf16.xpose.msra.mxu0 0
      %1428 = vmatprep.subr.bf16.mxu0 0
      %1429 = vmatpush1.bf16.xpose.msra.mxu0 0
      %1430 = vmatprep.subr.bf16.mxu0 0
      %1431 = vmatpush1.bf16.xpose.msra.mxu0 0
      %1432 = vmatprep.subr.bf16.mxu0 0
      %1433 = vmatpush1.bf16.xpose.msra.mxu0 0
      %1434 = vmatprep.subr.bf16.mxu0 0
      %1435 = vmatpush1.bf16.xpose.msra.mxu0 0
      %1436 = vmatprep.subr.bf16.mxu0 0
      %1437 = vmatpush1.bf16.xpose.msra.mxu0 0
      %1438 = vmatprep.subr.bf16.mxu0 0
      %1439 = vmatpush1.bf16.xpose.msra.mxu0 0
      %1440 = vmatprep.subr.bf16.mxu0 0
      %1441 = vmatpush1.bf16.xpose.msra.mxu0 0
      %1442 = vmatprep.mubr.bf16.mxu0 0
      %1443 = vmatmul.mubr.bf16.gmra.mrb[0].mxu0 %v1405
      %v1444 = vpop.f32.mrb[0].mxu0
      %v1445 = vadd.f32 0.0, %v1444
      %v1446 = vpop.f32.mrb[0].mxu0
      %v1447 = vpop.f32.mrb[0].mxu0
      %v1448 = vadd.f32 0.0, %v1447
      %v1449 = vpop.f32.mrb[0].mxu0
      %1450 = vdwg.mxu0
      %v1451 = vmul.f32 %v1398, 0.17677669
      %v1452 = vmul.f32 %v1401, 0.17677669
      %v1453 = vmul.f32 %v1445, 0.17677669
      %v1454 = vmul.f32 %v1448, 0.17677669
      %v1455 = vadd.f32 %v1451, %v526
      %v1456 = vadd.f32 %v1452, %v527
      %v1457 = vadd.f32 %v1453, %v528
      %v1458 = vadd.f32 %v1454, %v529
      %v1459 = vsel %vm960, %v1455, -inf
      %1460 = vmax.xlane.f32.xlu0 %v1459
      %v1461 = vpop.xlane.xlu0 %1460
      %v1462 = vsel %vm960, %v1456, -inf
      %1463 = vmax.xlane.f32.xlu0 %v1462
      %v1464 = vpop.xlane.xlu0 %1463
      %v1465 = vsel %vm960, %v1457, -inf
      %1466 = vmax.xlane.f32.xlu0 %v1465
      %v1467 = vpop.xlane.xlu0 %1466
      %v1468 = vsel %vm960, %v1458, -inf
      %1469 = vmax.xlane.f32.xlu0 %v1468
      %v1470 = vpop.xlane.xlu0 %1469
      %v1471 = vsub.f32 %v1455, %v1461
      %v1472 = vsub.f32 %v1456, %v1464
      %v1473 = vsub.f32 %v1457, %v1467
      %v1474 = vsub.f32 %v1458, %v1470
      %v1475 = vmul.f32 %v1471, 1.442695
      %v1476 = vpow.pop %v1475
      %v1477 = vmul.f32 %v1472, 1.442695
      %v1478 = vpow.pop %v1477
      %v1479 = vmul.f32 %v1473, 1.442695
      %v1480 = vpow.pop %v1479
      %v1481 = vmul.f32 %v1474, 1.442695
      %v1482 = vpow.pop %v1481
      %v1483 = vsel %vm960, %v1476, 0.0
      %1484 = vadd.xlane.f32.xlu0 %v1483
      %v1485 = vpop.xlane.xlu0 %1484
      %v1486 = vsel %vm960, %v1478, 0.0
      %1487 = vadd.xlane.f32.xlu0 %v1486
      %v1488 = vpop.xlane.xlu0 %1487
      %v1489 = vsel %vm960, %v1480, 0.0
      %1490 = vadd.xlane.f32.xlu0 %v1489
      %v1491 = vpop.xlane.xlu0 %1490
      %v1492 = vsel %vm960, %v1482, 0.0
      %1493 = vadd.xlane.f32.xlu0 %v1492
      %v1494 = vpop.xlane.xlu0 %1493
      %v1495 = vmax.f32 %v1485, 1e-20
      %v1496 = vmax.f32 %v1488, 1e-20
      %v1497 = vmax.f32 %v1491, 1e-20
      %v1498 = vmax.f32 %v1494, 1e-20
      %v1499 = vrcp.pop %v1495
      %v1500 = vrcp.pop %v1496
      %v1501 = vrcp.pop %v1497
      %v1502 = vrcp.pop %v1498
      %v1503 = vmul.f32 %v1476, %v1499
      %v1504 = vmul.f32 %v1478, %v1500
      %v1505 = vmul.f32 %v1480, %v1501
      %v1506 = vmul.f32 %v1482, %v1502
      %v1507 = vpack.c.bf16 %v1504, %v1503
      %v1508 = vpack.c.bf16 %v1506, %v1505
      %v1510 = vsel %vm960, %v1507, 0
      %1512 = vmatprep.subr.bf16.mxu0 0
      %1513 = vmatpush1.bf16.msra.mxu0 %v1355
      %1514 = vmatprep.subr.bf16.mxu0 0
      %1515 = vmatpush1.bf16.msra.mxu0 0
      %1516 = vmatprep.subr.bf16.mxu0 0
      %1517 = vmatpush1.bf16.msra.mxu0 0
      %1518 = vmatprep.subr.bf16.mxu0 0
      %1519 = vmatpush1.bf16.msra.mxu0 0
      %1520 = vmatprep.subr.bf16.mxu0 0
      %1521 = vmatpush1.bf16.msra.mxu0 0
      %1522 = vmatprep.subr.bf16.mxu0 0
      %1523 = vmatpush1.bf16.msra.mxu0 0
      %1524 = vmatprep.subr.bf16.mxu0 0
      %1525 = vmatpush1.bf16.msra.mxu0 0
      %1526 = vmatprep.subr.bf16.mxu0 0
      %1527 = vmatpush1.bf16.msra.mxu0 0
      %1528 = vmatprep.subr.bf16.mxu0 0
      %1529 = vmatpush1.bf16.msra.mxu0 0
      %1530 = vmatprep.subr.bf16.mxu0 0
      %1531 = vmatpush1.bf16.msra.mxu0 0
      %1532 = vmatprep.subr.bf16.mxu0 0
      %1533 = vmatpush1.bf16.msra.mxu0 0
      %1534 = vmatprep.subr.bf16.mxu0 0
      %1535 = vmatpush1.bf16.msra.mxu0 0
      %1536 = vmatprep.subr.bf16.mxu0 0
      %1537 = vmatpush1.bf16.msra.mxu0 0
      %1538 = vmatprep.subr.bf16.mxu0 0
      %1539 = vmatpush1.bf16.msra.mxu0 0
      %1540 = vmatprep.subr.bf16.mxu0 0
      %1541 = vmatpush1.bf16.msra.mxu0 0
      %1542 = vmatprep.subr.bf16.mxu0 0
      %1543 = vmatpush1.bf16.msra.mxu0 0
      %1544 = vmatprep.mubr.bf16.mxu0 0
      %1545 = vmatmul.mubr.bf16.gmra.mrb[0].mxu0 %v1510
      %v1546 = vpop.f32.mrb[0].mxu0
      %v1547 = vadd.f32 0.0, %v1546
      %v1548 = vpop.f32.mrb[0].mxu0
      %v1549 = vpop.f32.mrb[0].mxu0
      %v1550 = vadd.f32 0.0, %v1549
      %v1551 = vpop.f32.mrb[0].mxu0
      %1552 = vdwg.mxu0
      %v1554 = vsel %vm960, %v1508, 0
      %1556 = vmatprep.subr.bf16.mxu0 0
      %1557 = vmatpush1.bf16.msra.mxu0 %v1356
      %1558 = vmatprep.subr.bf16.mxu0 0
      %1559 = vmatpush1.bf16.msra.mxu0 0
      %1560 = vmatprep.subr.bf16.mxu0 0
      %1561 = vmatpush1.bf16.msra.mxu0 0
      %1562 = vmatprep.subr.bf16.mxu0 0
      %1563 = vmatpush1.bf16.msra.mxu0 0
      %1564 = vmatprep.subr.bf16.mxu0 0
      %1565 = vmatpush1.bf16.msra.mxu0 0
      %1566 = vmatprep.subr.bf16.mxu0 0
      %1567 = vmatpush1.bf16.msra.mxu0 0
      %1568 = vmatprep.subr.bf16.mxu0 0
      %1569 = vmatpush1.bf16.msra.mxu0 0
      %1570 = vmatprep.subr.bf16.mxu0 0
      %1571 = vmatpush1.bf16.msra.mxu0 0
      %1572 = vmatprep.subr.bf16.mxu0 0
      %1573 = vmatpush1.bf16.msra.mxu0 0
      %1574 = vmatprep.subr.bf16.mxu0 0
      %1575 = vmatpush1.bf16.msra.mxu0 0
      %1576 = vmatprep.subr.bf16.mxu0 0
      %1577 = vmatpush1.bf16.msra.mxu0 0
      %1578 = vmatprep.subr.bf16.mxu0 0
      %1579 = vmatpush1.bf16.msra.mxu0 0
      %1580 = vmatprep.subr.bf16.mxu0 0
      %1581 = vmatpush1.bf16.msra.mxu0 0
      %1582 = vmatprep.subr.bf16.mxu0 0
      %1583 = vmatpush1.bf16.msra.mxu0 0
      %1584 = vmatprep.subr.bf16.mxu0 0
      %1585 = vmatpush1.bf16.msra.mxu0 0
      %1586 = vmatprep.subr.bf16.mxu0 0
      %1587 = vmatpush1.bf16.msra.mxu0 0
      %1588 = vmatprep.mubr.bf16.mxu0 0
      %1589 = vmatmul.mubr.bf16.gmra.mrb[0].mxu0 %v1554
      %v1590 = vpop.f32.mrb[0].mxu0
      %v1591 = vadd.f32 0.0, %v1590
      %v1592 = vpop.f32.mrb[0].mxu0
      %v1593 = vpop.f32.mrb[0].mxu0
      %v1594 = vadd.f32 0.0, %v1593
      %v1595 = vpop.f32.mrb[0].mxu0
      %1596 = vdwg.mxu0
      %v1597 = vpack.c.bf16 %v1550, %v1547
      %v1598 = vpack.c.bf16 %v1594, %v1591
      %s1599 = scalar_lea.vmem %s7, 16
      %v1600 = vld [vmem:[%s1599] sm:$0xf]
      %v1601 = vld [vmem:[%s1599 + $0x4] sm:$0xf]
      %v1602 = vld [vmem:[%s1599 + $0x8] sm:$0xf]
      %v1603 = vld [vmem:[%s1599 + $0xc] sm:$0xf]
      %v1608 = vunpack.c.l.b16 %v1600
      %v1609 = vunpack.c.l.b16 %v1601
      %v1610 = vunpack.c.l.b16 %v1602
      %v1611 = vunpack.c.l.b16 %v1603
      %v1612 = vpack.c.b16 %v1609, %v1608
      %v1613 = vpack.c.b16 %v1611, %v1610
      %v1617 = vsel %vm857, %v1597, 0
      %v1620 = vsel %vm857, %v1598, 0
      %1622 = vmatprep.subr.bf16.mxu0 0
      %1623 = vmatpush1.bf16.msra.mxu0 %v1612
      %1624 = vmatprep.subr.bf16.mxu0 0
      %1625 = vmatpush1.bf16.msra.mxu0 %v1613
      %1626 = vmatprep.subr.bf16.mxu0 0
      %1627 = vmatpush1.bf16.msra.mxu0 0
      %1628 = vmatprep.subr.bf16.mxu0 0
      %1629 = vmatpush1.bf16.msra.mxu0 0
      %1630 = vmatprep.subr.bf16.mxu0 0
      %1631 = vmatpush1.bf16.msra.mxu0 0
      %1632 = vmatprep.subr.bf16.mxu0 0
      %1633 = vmatpush1.bf16.msra.mxu0 0
      %1634 = vmatprep.subr.bf16.mxu0 0
      %1635 = vmatpush1.bf16.msra.mxu0 0
      %1636 = vmatprep.subr.bf16.mxu0 0
      %1637 = vmatpush1.bf16.msra.mxu0 0
      %1638 = vmatprep.subr.bf16.mxu0 0
      %1639 = vmatpush1.bf16.msra.mxu0 0
      %1640 = vmatprep.subr.bf16.mxu0 0
      %1641 = vmatpush1.bf16.msra.mxu0 0
      %1642 = vmatprep.subr.bf16.mxu0 0
      %1643 = vmatpush1.bf16.msra.mxu0 0
      %1644 = vmatprep.subr.bf16.mxu0 0
      %1645 = vmatpush1.bf16.msra.mxu0 0
      %1646 = vmatprep.subr.bf16.mxu0 0
      %1647 = vmatpush1.bf16.msra.mxu0 0
      %1648 = vmatprep.subr.bf16.mxu0 0
      %1649 = vmatpush1.bf16.msra.mxu0 0
      %1650 = vmatprep.subr.bf16.mxu0 0
      %1651 = vmatpush1.bf16.msra.mxu0 0
      %1652 = vmatprep.subr.bf16.mxu0 0
      %1653 = vmatpush1.bf16.msra.mxu0 0
      %1654 = vmatprep.mubr.bf16.mxu0 0
      %1655 = vmatmul.mubr.bf16.gmra.mrb[0].mxu0 %v1617
      %v1656 = vpop.f32.mrb[0].mxu0
      %v1657 = vadd.f32 0.0, %v1656
      %v1658 = vpop.f32.mrb[0].mxu0
      %v1659 = vpop.f32.mrb[0].mxu0
      %v1660 = vadd.f32 0.0, %v1659
      %v1661 = vpop.f32.mrb[0].mxu0
      %1662 = vmatprep.mubr.bf16.mxu0 0
      %1663 = vmatmul.mubr.bf16.gmra.mrb[0].mxu0 %v1620
      %v1664 = vpop.f32.mrb[0].mxu0
      %v1665 = vadd.f32 0.0, %v1664
      %v1666 = vpop.f32.mrb[0].mxu0
      %v1667 = vpop.f32.mrb[0].mxu0
      %v1668 = vadd.f32 0.0, %v1667
      %v1669 = vpop.f32.mrb[0].mxu0
      %1670 = vdwg.mxu0
      %v1675 = vunpack.c.l.b16 %v1101
      %v1676 = vunpack.c.l.b16 %v1102
      %v1677 = vunpack.c.l.b16 %v1103
      %v1678 = vunpack.c.l.b16 %v1104
      %v1679 = vpack.c.b16 %v1676, %v1675
      %v1680 = vpack.c.b16 %v1678, %v1677
      %v1684 = vsel %vm857, %v1099, 0
      %v1687 = vsel %vm857, %v1100, 0
      %1689 = vmatprep.subr.bf16.mxu0 0
      %1690 = vmatpush1.bf16.msra.mxu0 %v1679
      %1691 = vmatprep.subr.bf16.mxu0 0
      %1692 = vmatpush1.bf16.msra.mxu0 %v1680
      %1693 = vmatprep.subr.bf16.mxu0 0
      %1694 = vmatpush1.bf16.msra.mxu0 0
      %1695 = vmatprep.subr.bf16.mxu0 0
      %1696 = vmatpush1.bf16.msra.mxu0 0
      %1697 = vmatprep.subr.bf16.mxu0 0
      %1698 = vmatpush1.bf16.msra.mxu0 0
      %1699 = vmatprep.subr.bf16.mxu0 0
      %1700 = vmatpush1.bf16.msra.mxu0 0
      %1701 = vmatprep.subr.bf16.mxu0 0
      %1702 = vmatpush1.bf16.msra.mxu0 0
      %1703 = vmatprep.subr.bf16.mxu0 0
      %1704 = vmatpush1.bf16.msra.mxu0 0
      %1705 = vmatprep.subr.bf16.mxu0 0
      %1706 = vmatpush1.bf16.msra.mxu0 0
      %1707 = vmatprep.subr.bf16.mxu0 0
      %1708 = vmatpush1.bf16.msra.mxu0 0
      %1709 = vmatprep.subr.bf16.mxu0 0
      %1710 = vmatpush1.bf16.msra.mxu0 0
      %1711 = vmatprep.subr.bf16.mxu0 0
      %1712 = vmatpush1.bf16.msra.mxu0 0
      %1713 = vmatprep.subr.bf16.mxu0 0
      %1714 = vmatpush1.bf16.msra.mxu0 0
      %1715 = vmatprep.subr.bf16.mxu0 0
      %1716 = vmatpush1.bf16.msra.mxu0 0
      %1717 = vmatprep.subr.bf16.mxu0 0
      %1718 = vmatpush1.bf16.msra.mxu0 0
      %1719 = vmatprep.subr.bf16.mxu0 0
      %1720 = vmatpush1.bf16.msra.mxu0 0
      %1721 = vmatprep.mubr.bf16.mxu0 0
      %1722 = vmatmul.mubr.bf16.gmra.mrb[0].mxu0 %v1684
      %v1723 = vpop.f32.mrb[0].mxu0
      %v1724 = vadd.f32 %v1657, %v1723
      %v1725 = vpop.f32.mrb[0].mxu0
      %v1726 = vpop.f32.mrb[0].mxu0
      %v1727 = vadd.f32 %v1660, %v1726
      %v1728 = vpop.f32.mrb[0].mxu0
      %1729 = vmatprep.mubr.bf16.mxu0 0
      %1730 = vmatmul.mubr.bf16.gmra.mrb[0].mxu0 %v1687
      %v1731 = vpop.f32.mrb[0].mxu0
      %v1732 = vadd.f32 %v1665, %v1731
      %v1733 = vpop.f32.mrb[0].mxu0
      %v1734 = vpop.f32.mrb[0].mxu0
      %v1735 = vadd.f32 %v1668, %v1734
      %v1736 = vpop.f32.mrb[0].mxu0
      %1737 = vdwg.mxu0
      %v1738 = vadd.f32 %v489, %v1724
      %v1739 = vadd.f32 %v490, %v1727
      %v1740 = vadd.f32 %v491, %v1732
      %v1741 = vadd.f32 %v492, %v1735
      %v1742 = vsel %vm530, %v1738, 0.0
      %1743 = vadd.xlane.f32.xlu0 %v1742
      %v1744 = vpop.xlane.xlu0 %1743
      %v1745 = vsel %vm530, %v1739, 0.0
      %1746 = vadd.xlane.f32.xlu0 %v1745
      %v1747 = vpop.xlane.xlu0 %1746
      %v1748 = vsel %vm530, %v1740, 0.0
      %1749 = vadd.xlane.f32.xlu0 %v1748
      %v1750 = vpop.xlane.xlu0 %1749
      %v1751 = vsel %vm530, %v1741, 0.0
      %1752 = vadd.xlane.f32.xlu0 %v1751
      %v1753 = vpop.xlane.xlu0 %1752
      %v1754 = vmul.f32 %v1744, %v543
      %v1755 = vmul.f32 %v1747, %v543
      %v1756 = vmul.f32 %v1750, %v543
      %v1757 = vmul.f32 %v1753, %v543
      %v1758 = vsub.f32 %v1738, %v1754
      %v1759 = vsub.f32 %v1739, %v1755
      %v1760 = vsub.f32 %v1740, %v1756
      %v1761 = vsub.f32 %v1741, %v1757
      %v1762 = vmul.f32 %v1758, %v1758
      %v1763 = vmul.f32 %v1759, %v1759
      %v1764 = vmul.f32 %v1760, %v1760
      %v1765 = vmul.f32 %v1761, %v1761
      %v1766 = vsel %vm530, %v1762, 0.0
      %1767 = vadd.xlane.f32.xlu0 %v1766
      %v1768 = vpop.xlane.xlu0 %1767
      %v1769 = vsel %vm530, %v1763, 0.0
      %1770 = vadd.xlane.f32.xlu0 %v1769
      %v1771 = vpop.xlane.xlu0 %1770
      %v1772 = vsel %vm530, %v1764, 0.0
      %1773 = vadd.xlane.f32.xlu0 %v1772
      %v1774 = vpop.xlane.xlu0 %1773
      %v1775 = vsel %vm530, %v1765, 0.0
      %1776 = vadd.xlane.f32.xlu0 %v1775
      %v1777 = vpop.xlane.xlu0 %1776
      %v1778 = vmul.f32 %v1768, %v543
      %v1779 = vmul.f32 %v1771, %v543
      %v1780 = vmul.f32 %v1774, %v543
      %v1781 = vmul.f32 %v1777, %v543
      %v1782 = vadd.f32 %v1778, 1e-05
      %v1783 = vadd.f32 %v1779, 1e-05
      %v1784 = vadd.f32 %v1780, 1e-05
      %v1785 = vadd.f32 %v1781, 1e-05
      %v1786 = vrsqrt.pop %v1782
      %v1787 = vrsqrt.pop %v1783
      %v1788 = vrsqrt.pop %v1784
      %v1789 = vrsqrt.pop %v1785
      %v1790 = vmul.f32 %v1758, %v1786
      %v1791 = vmul.f32 %v1759, %v1787
      %v1792 = vmul.f32 %v1760, %v1788
      %v1793 = vmul.f32 %v1761, %v1789
      %v1794 = vlaneseq
      %v1795 = vshrl.u32 %v1794, 7
      %v1796 = vsub.s32 2, %v1795
      %v1797 = vrot.slane %v488, %v1796
      %v1798 = vmul.f32 %v1790, %v1797
      %v1799 = vmul.f32 %v1791, %v1797
      %v1800 = vmul.f32 %v1792, %v1797
      %v1801 = vmul.f32 %v1793, %v1797
      %v1802 = vlaneseq
      %v1803 = vshrl.u32 %v1802, 7
      %v1804 = vsub.s32 3, %v1803
      %v1805 = vrot.slane %v488, %v1804
      %v1806 = vadd.f32 %v1798, %v1805
      %v1807 = vadd.f32 %v1799, %v1805
      %v1808 = vadd.f32 %v1800, %v1805
      %v1809 = vadd.f32 %v1801, %v1805
      %v1810 = vpack.c.bf16 %v1807, %v1806
      %v1811 = vpack.c.bf16 %v1809, %v1808
      %v1812 = vld [vmem:[%s8] sm:$0xf]
      %v1813 = vld [vmem:[%s8 + $0x4] sm:$0xf]
      %v1814 = vld [vmem:[%s8 + $0x8] sm:$0xf]
      %v1815 = vld [vmem:[%s8 + $0xc] sm:$0xf]
      %v1816 = vld [vmem:[%s8 + $0x10] sm:$0xf]
      %v1817 = vld [vmem:[%s8 + $0x14] sm:$0xf]
      %v1818 = vld [vmem:[%s8 + $0x18] sm:$0xf]
      %v1819 = vld [vmem:[%s8 + $0x1c] sm:$0xf]
      %v1828 = vunpack.c.l.b16 %v1812
      %v1829 = vunpack.c.l.b16 %v1813
      %v1830 = vunpack.c.l.b16 %v1814
      %v1831 = vunpack.c.l.b16 %v1815
      %v1832 = vunpack.c.l.b16 %v1816
      %v1833 = vunpack.c.l.b16 %v1817
      %v1834 = vunpack.c.l.b16 %v1818
      %v1835 = vunpack.c.l.b16 %v1819
      %v1836 = vpack.c.b16 %v1829, %v1828
      %v1837 = vpack.c.b16 %v1831, %v1830
      %v1838 = vpack.c.b16 %v1833, %v1832
      %v1839 = vpack.c.b16 %v1835, %v1834
      %v1845 = vsel %vm530, %v1810, 0
      %v1848 = vsel %vm530, %v1811, 0
      %1850 = vmatprep.subr.bf16.mxu0 0
      %1851 = vmatpush1.bf16.msra.mxu0 %v1836
      %1852 = vmatprep.subr.bf16.mxu0 0
      %1853 = vmatpush1.bf16.msra.mxu0 %v1837
      %1854 = vmatprep.subr.bf16.mxu0 0
      %1855 = vmatpush1.bf16.msra.mxu0 %v1838
      %1856 = vmatprep.subr.bf16.mxu0 0
      %1857 = vmatpush1.bf16.msra.mxu0 %v1839
      %1858 = vmatprep.subr.bf16.mxu0 0
      %1859 = vmatpush1.bf16.msra.mxu0 0
      %1860 = vmatprep.subr.bf16.mxu0 0
      %1861 = vmatpush1.bf16.msra.mxu0 0
      %1862 = vmatprep.subr.bf16.mxu0 0
      %1863 = vmatpush1.bf16.msra.mxu0 0
      %1864 = vmatprep.subr.bf16.mxu0 0
      %1865 = vmatpush1.bf16.msra.mxu0 0
      %1866 = vmatprep.subr.bf16.mxu0 0
      %1867 = vmatpush1.bf16.msra.mxu0 0
      %1868 = vmatprep.subr.bf16.mxu0 0
      %1869 = vmatpush1.bf16.msra.mxu0 0
      %1870 = vmatprep.subr.bf16.mxu0 0
      %1871 = vmatpush1.bf16.msra.mxu0 0
      %1872 = vmatprep.subr.bf16.mxu0 0
      %1873 = vmatpush1.bf16.msra.mxu0 0
      %1874 = vmatprep.subr.bf16.mxu0 0
      %1875 = vmatpush1.bf16.msra.mxu0 0
      %1876 = vmatprep.subr.bf16.mxu0 0
      %1877 = vmatpush1.bf16.msra.mxu0 0
      %1878 = vmatprep.subr.bf16.mxu0 0
      %1879 = vmatpush1.bf16.msra.mxu0 0
      %1880 = vmatprep.subr.bf16.mxu0 0
      %1881 = vmatpush1.bf16.msra.mxu0 0
      %1882 = vmatprep.mubr.bf16.mxu0 0
      %1883 = vmatmul.mubr.bf16.gmra.mrb[0].mxu0 %v1845
      %v1884 = vpop.f32.mrb[0].mxu0
      %v1885 = vadd.f32 0.0, %v1884
      %v1886 = vpop.f32.mrb[0].mxu0
      %v1887 = vpop.f32.mrb[0].mxu0
      %v1888 = vadd.f32 0.0, %v1887
      %v1889 = vpop.f32.mrb[0].mxu0
      %1890 = vmatprep.mubr.bf16.mxu0 0
      %1891 = vmatmul.mubr.bf16.gmra.mrb[0].mxu0 %v1848
      %v1892 = vpop.f32.mrb[0].mxu0
      %v1893 = vadd.f32 0.0, %v1892
      %v1894 = vpop.f32.mrb[0].mxu0
      %v1895 = vpop.f32.mrb[0].mxu0
      %v1896 = vadd.f32 0.0, %v1895
      %v1897 = vpop.f32.mrb[0].mxu0
      %1898 = vdwg.mxu0
      %v1899 = vmul.f32 %v1885, %v1885
      %v1900 = vmul.f32 %v1888, %v1888
      %v1901 = vmul.f32 %v1893, %v1893
      %v1902 = vmul.f32 %v1896, %v1896
      %v1903 = vmul.f32 %v1885, %v1899
      %v1904 = vmul.f32 %v1888, %v1900
      %v1905 = vmul.f32 %v1893, %v1901
      %v1906 = vmul.f32 %v1896, %v1902
      %v1907 = vmul.f32 %v1903, 0.044715
      %v1908 = vmul.f32 %v1904, 0.044715
      %v1909 = vmul.f32 %v1905, 0.044715
      %v1910 = vmul.f32 %v1906, 0.044715
      %v1911 = vadd.f32 %v1885, %v1907
      %v1912 = vadd.f32 %v1888, %v1908
      %v1913 = vadd.f32 %v1893, %v1909
      %v1914 = vadd.f32 %v1896, %v1910
      %v1915 = vmul.f32 %v1911, 0.7978846
      %v1916 = vmul.f32 %v1912, 0.7978846
      %v1917 = vmul.f32 %v1913, 0.7978846
      %v1918 = vmul.f32 %v1914, 0.7978846
      %v1919 = vtanh.pop %v1915
      %v1920 = vtanh.pop %v1916
      %v1921 = vtanh.pop %v1917
      %v1922 = vtanh.pop %v1918
      %v1923 = vadd.f32 %v1919, 1.0
      %v1924 = vadd.f32 %v1920, 1.0
      %v1925 = vadd.f32 %v1921, 1.0
      %v1926 = vadd.f32 %v1922, 1.0
      %v1927 = vmul.f32 %v1923, 0.5
      %v1928 = vmul.f32 %v1924, 0.5
      %v1929 = vmul.f32 %v1925, 0.5
      %v1930 = vmul.f32 %v1926, 0.5
      %v1931 = vmul.f32 %v1885, %v1927
      %v1932 = vmul.f32 %v1888, %v1928
      %v1933 = vmul.f32 %v1893, %v1929
      %v1934 = vmul.f32 %v1896, %v1930
      %v1935 = vpack.c.bf16 %v1932, %v1931
      %v1936 = vpack.c.bf16 %v1934, %v1933
      %v1937 = vld [vmem:[%s9] sm:$0xf]
      %v1938 = vld [vmem:[%s9 + $0x4] sm:$0xf]
      %v1939 = vld [vmem:[%s9 + $0x8] sm:$0xf]
      %v1940 = vld [vmem:[%s9 + $0xc] sm:$0xf]
      %v1941 = vld [vmem:[%s9 + $0x10] sm:$0xf]
      %v1942 = vld [vmem:[%s9 + $0x14] sm:$0xf]
      %v1943 = vld [vmem:[%s9 + $0x18] sm:$0xf]
      %v1944 = vld [vmem:[%s9 + $0x1c] sm:$0xf]
      %v1945 = vld [vmem:[%s9 + $0x20] sm:$0xf]
      %v1946 = vld [vmem:[%s9 + $0x24] sm:$0xf]
      %v1947 = vld [vmem:[%s9 + $0x28] sm:$0xf]
      %v1948 = vld [vmem:[%s9 + $0x2c] sm:$0xf]
      %v1949 = vld [vmem:[%s9 + $0x30] sm:$0xf]
      %v1950 = vld [vmem:[%s9 + $0x34] sm:$0xf]
      %v1951 = vld [vmem:[%s9 + $0x38] sm:$0xf]
      %v1952 = vld [vmem:[%s9 + $0x3c] sm:$0xf]
      %v1969 = vunpack.c.l.b16 %v1937
      %v1970 = vunpack.c.l.b16 %v1938
      %v1971 = vunpack.c.l.b16 %v1939
      %v1972 = vunpack.c.l.b16 %v1940
      %v1973 = vunpack.c.l.b16 %v1941
      %v1974 = vunpack.c.l.b16 %v1942
      %v1975 = vunpack.c.l.b16 %v1943
      %v1976 = vunpack.c.l.b16 %v1944
      %v1977 = vunpack.c.l.b16 %v1945
      %v1978 = vunpack.c.l.b16 %v1946
      %v1979 = vunpack.c.l.b16 %v1947
      %v1980 = vunpack.c.l.b16 %v1948
      %v1981 = vunpack.c.l.b16 %v1949
      %v1982 = vunpack.c.l.b16 %v1950
      %v1983 = vunpack.c.l.b16 %v1951
      %v1984 = vunpack.c.l.b16 %v1952
      %v1985 = vpack.c.b16 %v1970, %v1969
      %v1986 = vpack.c.b16 %v1972, %v1971
      %v1987 = vpack.c.b16 %v1974, %v1973
      %v1988 = vpack.c.b16 %v1976, %v1975
      %v1989 = vpack.c.b16 %v1978, %v1977
      %v1990 = vpack.c.b16 %v1980, %v1979
      %v1991 = vpack.c.b16 %v1982, %v1981
      %v1992 = vpack.c.b16 %v1984, %v1983
      %2001 = vmatprep.subr.bf16.mxu0 0
      %2002 = vmatpush1.bf16.msra.mxu0 %v1985
      %2003 = vmatprep.subr.bf16.mxu0 0
      %2004 = vmatpush1.bf16.msra.mxu0 %v1986
      %2005 = vmatprep.subr.bf16.mxu0 0
      %2006 = vmatpush1.bf16.msra.mxu0 %v1987
      %2007 = vmatprep.subr.bf16.mxu0 0
      %2008 = vmatpush1.bf16.msra.mxu0 %v1988
      %2009 = vmatprep.subr.bf16.mxu0 0
      %2010 = vmatpush1.bf16.msra.mxu0 %v1989
      %2011 = vmatprep.subr.bf16.mxu0 0
      %2012 = vmatpush1.bf16.msra.mxu0 %v1990
      %2013 = vmatprep.subr.bf16.mxu0 0
      %2014 = vmatpush1.bf16.msra.mxu0 %v1991
      %2015 = vmatprep.subr.bf16.mxu0 0
      %2016 = vmatpush1.bf16.msra.mxu0 %v1992
      %2017 = vmatprep.subr.bf16.mxu0 0
      %2018 = vmatpush1.bf16.msra.mxu0 0
      %2019 = vmatprep.subr.bf16.mxu0 0
      %2020 = vmatpush1.bf16.msra.mxu0 0
      %2021 = vmatprep.subr.bf16.mxu0 0
      %2022 = vmatpush1.bf16.msra.mxu0 0
      %2023 = vmatprep.subr.bf16.mxu0 0
      %2024 = vmatpush1.bf16.msra.mxu0 0
      %2025 = vmatprep.subr.bf16.mxu0 0
      %2026 = vmatpush1.bf16.msra.mxu0 0
      %2027 = vmatprep.subr.bf16.mxu0 0
      %2028 = vmatpush1.bf16.msra.mxu0 0
      %2029 = vmatprep.subr.bf16.mxu0 0
      %2030 = vmatpush1.bf16.msra.mxu0 0
      %2031 = vmatprep.subr.bf16.mxu0 0
      %2032 = vmatpush1.bf16.msra.mxu0 0
      %2033 = vmatprep.mubr.bf16.mxu0 0
      %2034 = vmatmul.mubr.bf16.gmra.mrb[0].mxu0 %v1935
      %v2035 = vpop.f32.mrb[0].mxu0
      %v2036 = vadd.f32 0.0, %v2035
      %v2037 = vpop.f32.mrb[0].mxu0
      %v2038 = vpop.f32.mrb[0].mxu0
      %v2039 = vadd.f32 0.0, %v2038
      %v2040 = vpop.f32.mrb[0].mxu0
      %2041 = vmatprep.mubr.bf16.mxu0 0
      %2042 = vmatmul.mubr.bf16.gmra.mrb[0].mxu0 %v1936
      %v2043 = vpop.f32.mrb[0].mxu0
      %v2044 = vadd.f32 0.0, %v2043
      %v2045 = vpop.f32.mrb[0].mxu0
      %v2046 = vpop.f32.mrb[0].mxu0
      %v2047 = vadd.f32 0.0, %v2046
      %v2048 = vpop.f32.mrb[0].mxu0
      %2049 = vdwg.mxu0
      %v2050 = vadd.f32 %v1738, %v2036
      %v2051 = vadd.f32 %v1739, %v2039
      %v2052 = vadd.f32 %v1740, %v2044
      %v2053 = vadd.f32 %v1741, %v2047
      %v2054 = vsel %vm530, %v2050, 0.0
      %2055 = vadd.xlane.f32.xlu0 %v2054
      %v2056 = vpop.xlane.xlu0 %2055
      %v2057 = vsel %vm530, %v2051, 0.0
      %2058 = vadd.xlane.f32.xlu0 %v2057
      %v2059 = vpop.xlane.xlu0 %2058
      %v2060 = vsel %vm530, %v2052, 0.0
      %2061 = vadd.xlane.f32.xlu0 %v2060
      %v2062 = vpop.xlane.xlu0 %2061
      %v2063 = vsel %vm530, %v2053, 0.0
      %2064 = vadd.xlane.f32.xlu0 %v2063
      %v2065 = vpop.xlane.xlu0 %2064
      %v2066 = vmul.f32 %v2056, %v543
      %v2067 = vmul.f32 %v2059, %v543
      %v2068 = vmul.f32 %v2062, %v543
      %v2069 = vmul.f32 %v2065, %v543
      %v2070 = vsub.f32 %v2050, %v2066
      %v2071 = vsub.f32 %v2051, %v2067
      %v2072 = vsub.f32 %v2052, %v2068
      %v2073 = vsub.f32 %v2053, %v2069
      %v2074 = vmul.f32 %v2070, %v2070
      %v2075 = vmul.f32 %v2071, %v2071
      %v2076 = vmul.f32 %v2072, %v2072
      %v2077 = vmul.f32 %v2073, %v2073
      %v2078 = vsel %vm530, %v2074, 0.0
      %2079 = vadd.xlane.f32.xlu0 %v2078
      %v2080 = vpop.xlane.xlu0 %2079
      %v2081 = vsel %vm530, %v2075, 0.0
      %2082 = vadd.xlane.f32.xlu0 %v2081
      %v2083 = vpop.xlane.xlu0 %2082
      %v2084 = vsel %vm530, %v2076, 0.0
      %2085 = vadd.xlane.f32.xlu0 %v2084
      %v2086 = vpop.xlane.xlu0 %2085
      %v2087 = vsel %vm530, %v2077, 0.0
      %2088 = vadd.xlane.f32.xlu0 %v2087
      %v2089 = vpop.xlane.xlu0 %2088
      %v2090 = vmul.f32 %v2080, %v543
      %v2091 = vmul.f32 %v2083, %v543
      %v2092 = vmul.f32 %v2086, %v543
      %v2093 = vmul.f32 %v2089, %v543
      %v2094 = vadd.f32 %v2090, 1e-05
      %v2095 = vadd.f32 %v2091, 1e-05
      %v2096 = vadd.f32 %v2092, 1e-05
      %v2097 = vadd.f32 %v2093, 1e-05
      %v2098 = vrsqrt.pop %v2094
      %v2099 = vrsqrt.pop %v2095
      %v2100 = vrsqrt.pop %v2096
      %v2101 = vrsqrt.pop %v2097
      %v2102 = vmul.f32 %v2070, %v2098
      %v2103 = vmul.f32 %v2071, %v2099
      %v2104 = vmul.f32 %v2072, %v2100
      %v2105 = vmul.f32 %v2073, %v2101
      %v2106 = vlaneseq
      %v2107 = vshrl.u32 %v2106, 7
      %v2108 = vsub.s32 4, %v2107
      %v2109 = vrot.slane %v488, %v2108
      %v2110 = vmul.f32 %v2102, %v2109
      %v2111 = vmul.f32 %v2103, %v2109
      %v2112 = vmul.f32 %v2104, %v2109
      %v2113 = vmul.f32 %v2105, %v2109
      %v2114 = vlaneseq
      %v2115 = vshrl.u32 %v2114, 7
      %v2116 = vsub.s32 5, %v2115
      %v2117 = vrot.slane %v488, %v2116
      %v2118 = vadd.f32 %v2110, %v2117
      %v2119 = vadd.f32 %v2111, %v2117
      %v2120 = vadd.f32 %v2112, %v2117
      %v2121 = vadd.f32 %v2113, %v2117
      %v2122 = vpack.c.bf16 %v2119, %v2118
      %v2123 = vpack.c.bf16 %v2121, %v2120
      %v2124 = vld [vmem:[%s10] sm:$0xf]
      %v2125 = vld [vmem:[%s10 + $0x4] sm:$0xf]
      %v2126 = vld [vmem:[%s10 + $0x8] sm:$0xf]
      %v2127 = vld [vmem:[%s10 + $0xc] sm:$0xf]
      %v2128 = vld [vmem:[%s10 + $0x10] sm:$0xf]
      %v2129 = vld [vmem:[%s10 + $0x14] sm:$0xf]
      %v2130 = vld [vmem:[%s10 + $0x18] sm:$0xf]
      %v2131 = vld [vmem:[%s10 + $0x1c] sm:$0xf]
      %v2140 = vunpack.c.l.b16 %v2124
      %v2141 = vunpack.c.l.b16 %v2125
      %v2142 = vunpack.c.l.b16 %v2126
      %v2143 = vunpack.c.l.b16 %v2127
      %v2144 = vunpack.c.l.b16 %v2128
      %v2145 = vunpack.c.l.b16 %v2129
      %v2146 = vunpack.c.l.b16 %v2130
      %v2147 = vunpack.c.l.b16 %v2131
      %v2148 = vpack.c.b16 %v2141, %v2140
      %v2149 = vpack.c.b16 %v2143, %v2142
      %v2150 = vpack.c.b16 %v2145, %v2144
      %v2151 = vpack.c.b16 %v2147, %v2146
      %v2157 = vsel %vm530, %v2122, 0
      %v2160 = vsel %vm530, %v2123, 0
      %2162 = vmatprep.subr.bf16.mxu0 0
      %2163 = vmatpush1.bf16.msra.mxu0 %v2148
      %2164 = vmatprep.subr.bf16.mxu0 0
      %2165 = vmatpush1.bf16.msra.mxu0 %v2149
      %2166 = vmatprep.subr.bf16.mxu0 0
      %2167 = vmatpush1.bf16.msra.mxu0 %v2150
      %2168 = vmatprep.subr.bf16.mxu0 0
      %2169 = vmatpush1.bf16.msra.mxu0 %v2151
      %2170 = vmatprep.subr.bf16.mxu0 0
      %2171 = vmatpush1.bf16.msra.mxu0 0
      %2172 = vmatprep.subr.bf16.mxu0 0
      %2173 = vmatpush1.bf16.msra.mxu0 0
      %2174 = vmatprep.subr.bf16.mxu0 0
      %2175 = vmatpush1.bf16.msra.mxu0 0
      %2176 = vmatprep.subr.bf16.mxu0 0
      %2177 = vmatpush1.bf16.msra.mxu0 0
      %2178 = vmatprep.subr.bf16.mxu0 0
      %2179 = vmatpush1.bf16.msra.mxu0 0
      %2180 = vmatprep.subr.bf16.mxu0 0
      %2181 = vmatpush1.bf16.msra.mxu0 0
      %2182 = vmatprep.subr.bf16.mxu0 0
      %2183 = vmatpush1.bf16.msra.mxu0 0
      %2184 = vmatprep.subr.bf16.mxu0 0
      %2185 = vmatpush1.bf16.msra.mxu0 0
      %2186 = vmatprep.subr.bf16.mxu0 0
      %2187 = vmatpush1.bf16.msra.mxu0 0
      %2188 = vmatprep.subr.bf16.mxu0 0
      %2189 = vmatpush1.bf16.msra.mxu0 0
      %2190 = vmatprep.subr.bf16.mxu0 0
      %2191 = vmatpush1.bf16.msra.mxu0 0
      %2192 = vmatprep.subr.bf16.mxu0 0
      %2193 = vmatpush1.bf16.msra.mxu0 0
      %2194 = vmatprep.mubr.bf16.mxu0 0
      %2195 = vmatmul.mubr.bf16.gmra.mrb[0].mxu0 %v2157
      %v2196 = vpop.f32.mrb[0].mxu0
      %v2197 = vadd.f32 0.0, %v2196
      %v2198 = vpop.f32.mrb[0].mxu0
      %v2199 = vpop.f32.mrb[0].mxu0
      %v2200 = vadd.f32 0.0, %v2199
      %v2201 = vpop.f32.mrb[0].mxu0
      %2202 = vmatprep.mubr.bf16.mxu0 0
      %2203 = vmatmul.mubr.bf16.gmra.mrb[0].mxu0 %v2160
      %v2204 = vpop.f32.mrb[0].mxu0
      %v2205 = vadd.f32 0.0, %v2204
      %v2206 = vpop.f32.mrb[0].mxu0
      %v2207 = vpop.f32.mrb[0].mxu0
      %v2208 = vadd.f32 0.0, %v2207
      %v2209 = vpop.f32.mrb[0].mxu0
      %2210 = vdwg.mxu0
      %2211 = vmax.xlane.f32.xlu0 %v2197
      %v2212 = vpop.xlane.xlu0 %2211
      %2213 = vmax.xlane.f32.xlu0 %v2200
      %v2214 = vpop.xlane.xlu0 %2213
      %2215 = vmax.xlane.f32.xlu0 %v2205
      %v2216 = vpop.xlane.xlu0 %2215
      %2217 = vmax.xlane.f32.xlu0 %v2208
      %v2218 = vpop.xlane.xlu0 %2217
      %v2219 = vsub.f32 %v2197, %v2212
      %v2220 = vsub.f32 %v2200, %v2214
      %v2221 = vsub.f32 %v2205, %v2216
      %v2222 = vsub.f32 %v2208, %v2218
      %v2223 = vmul.f32 %v2219, 1.442695
      %v2224 = vpow.pop %v2223
      %v2225 = vmul.f32 %v2220, 1.442695
      %v2226 = vpow.pop %v2225
      %v2227 = vmul.f32 %v2221, 1.442695
      %v2228 = vpow.pop %v2227
      %v2229 = vmul.f32 %v2222, 1.442695
      %v2230 = vpow.pop %v2229
      %2231 = vadd.xlane.f32.xlu0 %v2224
      %v2232 = vpop.xlane.xlu0 %2231
      %2233 = vadd.xlane.f32.xlu0 %v2226
      %v2234 = vpop.xlane.xlu0 %2233
      %2235 = vadd.xlane.f32.xlu0 %v2228
      %v2236 = vpop.xlane.xlu0 %2235
      %2237 = vadd.xlane.f32.xlu0 %v2230
      %v2238 = vpop.xlane.xlu0 %2237
      %v2239 = vlog2.pop %v2232
      %v2240 = vmul.f32 %v2239, 0.6931472
      %v2241 = vlog2.pop %v2234
      %v2242 = vmul.f32 %v2241, 0.6931472
      %v2243 = vlog2.pop %v2236
      %v2244 = vmul.f32 %v2243, 0.6931472
      %v2245 = vlog2.pop %v2238
      %v2246 = vmul.f32 %v2245, 0.6931472
      %v2247 = vld [vmem:[%s473] sm:$0xff]
      %v2248 = vld [vmem:[%s473 + $0x8] sm:$0xff]
      %v2249 = vld [vmem:[%s473 + $0x10] sm:$0xff]
      %v2250 = vld [vmem:[%s473 + $0x18] sm:$0xff]
      %v2251 = vld [vmem:[%s480] sm:$0xff]
      %v2252 = vld [vmem:[%s480 + $0x8] sm:$0xff]
      %v2253 = vld [vmem:[%s480 + $0x10] sm:$0xff]
      %v2254 = vld [vmem:[%s480 + $0x18] sm:$0xff]
      %2255 = vset.pattern.permute.xlu0 0
      %2256 = vperm.xlu0 %2255, %v2247
      %v2257 = vpop.permute.xlu0 %2256
      %2258 = vset.pattern.permute.xlu0 0
      %2259 = vperm.xlu0 %2258, %v2248
      %v2260 = vpop.permute.xlu0 %2259
      %2261 = vset.pattern.permute.xlu0 0
      %2262 = vperm.xlu0 %2261, %v2249
      %v2263 = vpop.permute.xlu0 %2262
      %2264 = vset.pattern.permute.xlu0 0
      %2265 = vperm.xlu0 %2264, %v2250
      %v2266 = vpop.permute.xlu0 %2265
      %vm2267 = vcmp.eq.s32.totalorder %v497, %v2257
      %vm2268 = vcmp.eq.s32.totalorder %v497, %v2260
      %vm2269 = vcmp.eq.s32.totalorder %v497, %v2263
      %vm2270 = vcmp.eq.s32.totalorder %v497, %v2266
      %v2271 = vsel %vm2267, 1, 0
      %v2272 = vsel %vm2268, 1, 0
      %v2273 = vsel %vm2269, 1, 0
      %v2274 = vsel %vm2270, 1, 0
      %v2275 = vcvt.s32.f32 %v2271
      %v2276 = vcvt.s32.f32 %v2272
      %v2277 = vcvt.s32.f32 %v2273
      %v2278 = vcvt.s32.f32 %v2274
      %v2279 = vmul.f32 %v2219, %v2275
      %v2280 = vmul.f32 %v2220, %v2276
      %v2281 = vmul.f32 %v2221, %v2277
      %v2282 = vmul.f32 %v2222, %v2278
      %2283 = vadd.xlane.f32.xlu0 %v2279
      %v2284 = vpop.xlane.xlu0 %2283
      %2285 = vadd.xlane.f32.xlu0 %v2280
      %v2286 = vpop.xlane.xlu0 %2285
      %2287 = vadd.xlane.f32.xlu0 %v2281
      %v2288 = vpop.xlane.xlu0 %2287
      %2289 = vadd.xlane.f32.xlu0 %v2282
      %v2290 = vpop.xlane.xlu0 %2289
      %v2291 = vsub.f32 %v2284, %v2240
      %v2292 = vsub.f32 %v2286, %v2242
      %v2293 = vsub.f32 %v2288, %v2244
      %v2294 = vsub.f32 %v2290, %v2246
      %v2295 = vmul.f32 %v2291, %v2251
      %v2296 = vmul.f32 %v2292, %v2252
      %v2297 = vmul.f32 %v2293, %v2253
      %v2298 = vmul.f32 %v2294, %v2254
      %vm2299 = vcmask 7168
      %v2300 = vsel %vm2299, %v2295, 0.0
      %v2301 = vsel %vm2299, %v2296, 0.0
      %v2302 = vadd.f32 %v2300, %v2301
      %v2303 = vrot.slane %v2302, 4
      %v2304 = vadd.f32 %v2302, %v2303
      %v2305 = vrot.slane %v2304, 2
      %v2306 = vadd.f32 %v2304, %v2305
      %v2307 = vrot.slane %v2306, 1
      %v2308 = vadd.f32 %v2306, %v2307
      %v2309 = vsel %vm2299, %v2297, 0.0
      %v2310 = vsel %vm2299, %v2298, 0.0
      %v2311 = vadd.f32 %v2309, %v2310
      %v2312 = vrot.slane %v2311, 4
      %v2313 = vadd.f32 %v2311, %v2312
      %v2314 = vrot.slane %v2313, 2
      %v2315 = vadd.f32 %v2313, %v2314
      %v2316 = vrot.slane %v2315, 1
      %v2317 = vadd.f32 %v2315, %v2316
      %vm2318 = vcmask 0
      %2319 = vst.msk [vmem:[%s485] sm:$0x1] %vm2318, %v2308
      %2320 = vst.msk [vmem:[%s485 + $0x1] sm:$0x1] %vm2318, %v2317
      %s2321 = smul.u32 2, %s23
      %p2322 = scmp.lt.s32.totalorder %s2321, 3
      %s2323 = scalar_select %p2322, %s2321, 3
      %s2324 = scalar_lea.vmem %s12, %s2323
      // Predicated region
      $region69: #{tpu_custom_call.1} parent=67 // pred_check
        %p2325 = pneg %p313
      $region70: #{tpu_custom_call.1} parent=67 // pred_check_branch
        %2327 = sbr.rel (%p2325) target = $region72
      $region71: #{tpu_custom_call.1} parent=67 // pred_region
        %s2328 = smul.u32 2, %s23
      $region72: #{tpu_custom_call.1} parent=67 // pred_fallthru
        _
    $region68: #{tpu_custom_call.1} parent=5 // pred_fallthru
      _
    %p2329 = scmp.le.s32.totalorder 2, %s18
    // Predicated region
    $region73: #{tpu_custom_call.1} parent=5 // pred_check
      %p2330 = pneg %p2329
    $region74: #{tpu_custom_call.1} parent=5 // pred_check_branch
      %2332 = sbr.rel (%p2330) target = $region76
    $region75: #{tpu_custom_call.1} parent=5 // pred_region
      %s2333 = ssub.s32 %s18, 2
      // Predicated region
      $region77: #{tpu_custom_call.1} parent=75 // pred_check
        %p2334 = pneg %p319
      $region78: #{tpu_custom_call.1} parent=75 // pred_check_branch
        %2336 = sbr.rel (%p2334) target = $region80
      $region79: #{tpu_custom_call.1} parent=75 // pred_region
        %s2337 = smul.u32 2, %s24
        %p2338 = scmp.lt.s32.totalorder %s2337, 3
        %s2339 = scalar_select %p2338, %s2337, 3
        %s2340 = scalar_lea.vmem %s12, %s2339
      $region80: #{tpu_custom_call.1} parent=75 // pred_fallthru
        _
    $region76: #{tpu_custom_call.1} parent=5 // pred_fallthru
      _
  $region6: #{tpu_custom_call.1} parent=0 // loop_footer
    %s22 = sadd.s32 1, %s18
  $region7: #{tpu_custom_call.1} parent=0 // loop_footer_branch
    %17 = sbr.rel target = $region3
  $region8: #{tpu_custom_call.1} parent=0 // loop_exit
    _

</llo_original>
